<compile_context>
chip_gen: v6e
topology: v6e:2x2x1
jax: 0.10.0
libtpu: 0.0.40
codegen_flags: <defaults>
</compile_context>

<pallas_src>
import functools

import jax
import jax.numpy as jnp
from jax import lax
from jax.experimental import pallas as pl
from jax.experimental.pallas import tpu as pltpu

EPS = 1e-5  # PyTorch InstanceNorm2d default eps


def _bottleneck_kernel(x_ref, w1_ref, w2_ref, cm_ref, out_ref, *, W, HW):
    # x_ref:   (1, Cin, HWp)       one image, channels x flattened (lane-padded) spatial
    # w1_ref:  (Cmid, Cin)         1x1 conv weight
    # w2_ref:  (9, K, Cmid)        3x3 conv weight, tap index = (dy+1)*3 + (dx+1)
    # cm_ref:  (2, HWp)            horizontal border helpers: [col>0, col<W-1] as 0/1 f32
    # out_ref: (1, Cin+K, HWp)     concatenated output [x ; conv branch]
    _, Cin, HWp = x_ref.shape
    K = w2_ref.shape[1]
    inv_hw = 1.0 / HW

    x = x_ref[0]  # (Cin, HWp)

    # Flat spatial index on the lane axis (for in-kernel tap masks / lane padding).
    pos = lax.broadcasted_iota(jnp.int32, (1, HWp), 1)

    # InstanceNorm2d #1 — one-pass stats (sum & sum-sq together), clamp var at 0 — then ReLU.
    mean1 = jnp.sum(x, axis=1, keepdims=True) * inv_hw
    var1 = jnp.maximum(jnp.sum(x * x, axis=1, keepdims=True) * inv_hw - mean1 * mean1, 0.0)
    xr = jnp.maximum((x - mean1) * lax.rsqrt(var1 + EPS), 0.0)
    if HWp != HW:
        # Keep padded lanes exactly zero so InstanceNorm #2 stats stay exact.
        xr = xr * (pos < HW).astype(jnp.float32)

    # 1x1 conv == (Cmid, Cin) @ (Cin, HWp)
    h = jnp.dot(w1_ref[...], xr, preferred_element_type=jnp.float32)  # (Cmid, HWp)

    # InstanceNorm2d #2 + ReLU (same one-pass stats).
    mean2 = jnp.sum(h, axis=1, keepdims=True) * inv_hw
    var2 = jnp.maximum(jnp.sum(h * h, axis=1, keepdims=True) * inv_hw - mean2 * mean2, 0.0)
    hr = jnp.maximum((h - mean2) * lax.rsqrt(var2 + EPS), 0.0)          # (Cmid, HWp)

    w2 = w2_ref[...]   # (9, K, Cmid)
    cm = cm_ref[...]   # (2, HWp)

    # 3x3 conv (padding=1) as 9 lane-rotated matmuls; validity mask applied AFTER each matmul
    # (per spatial column, broadcast over the K output rows — bit-identical to pre-masking).
    acc = jnp.zeros((K, HWp), jnp.float32)
    for dy in (-1, 0, 1):
        if dy == 0:
            vmask = None
        else:
            q = pos + dy * W   # flat index of the source pixel row-shifted by dy
            vmask = ((q >= 0) & (q < HW)).astype(jnp.float32)           # (1, HWp)
        for dx in (-1, 0, 1):
            t = (dy + 1) * 3 + (dx + 1)
            s = dy * W + dx
            # shifted[:, p] = hr[:, p + s]  (wrap-around lands only in masked columns)
            shifted = hr if s == 0 else pltpu.roll(hr, (-s) % HWp, 1)
            contrib = jnp.dot(w2[t], shifted,
                              preferred_element_type=jnp.float32)       # (K, HWp)
            hmask = None if dx == 0 else (cm[0:1] if dx == -1 else cm[1:2])
            if vmask is None:
                m = hmask
            elif hmask is None:
                m = vmask
            else:
                m = vmask * hmask
            acc = acc + (contrib if m is None else contrib * m)

    # Fused concat: x into the first Cin channel rows, conv branch into the last K.
    # (At these channel counts Cin+K = 8, i.e. the two stores cover one aligned sublane tile.)
    out_ref[0, 0:Cin, :] = x.astype(out_ref.dtype)
    out_ref[0, Cin:Cin + K, :] = acc.astype(out_ref.dtype)


def bottleneck_forward(x_nchw, w1_oihw, w2_oihw):
    """x: (N, Cin, H, W); w1: (4k, Cin, 1, 1); w2: (k, 4k, 3, 3). Returns (N, Cin+k, H, W)."""
    N, Cin, H, W = x_nchw.shape
    Cmid = w1_oihw.shape[0]          # 4k
    K = w2_oihw.shape[0]             # k
    HW = H * W
    HWp = ((HW + 127) // 128) * 128  # lane-dense flattened spatial axis

    x_flat = x_nchw.reshape(N, Cin, HW).astype(jnp.float32)
    if HWp != HW:
        x_flat = jnp.pad(x_flat, ((0, 0), (0, 0), (0, HWp - HW)))

    w1_mat = w1_oihw[:, :, 0, 0].astype(jnp.float32)                               # (Cmid, Cin)
    w2_taps = jnp.transpose(w2_oihw, (2, 3, 0, 1)).reshape(9, K, Cmid)             # (tap, K, Cmid)
    w2_taps = w2_taps.astype(jnp.float32)

    # Tiny horizontal-border helper (col>0, col<W-1); vertical tap validity is generated
    # in-kernel from a lane iota, so the old (9, 1, HW) mask input is gone.
    col = jnp.arange(HW, dtype=jnp.int32) % W
    colmask = jnp.stack([(col > 0), (col < W - 1)], axis=0).astype(jnp.float32)    # (2, HW)
    if HWp != HW:
        colmask = jnp.pad(colmask, ((0, 0), (0, HWp - HW)))

    kernel = functools.partial(_bottleneck_kernel, W=W, HW=HW)

    grid_spec = pltpu.PrefetchScalarGridSpec(
        num_scalar_prefetch=0,
        grid=(N,),
        in_specs=[
            pl.BlockSpec((1, Cin, HWp), lambda n: (n, 0, 0)),
            pl.BlockSpec((Cmid, Cin), lambda n: (0, 0)),
            pl.BlockSpec((9, K, Cmid), lambda n: (0, 0, 0)),
            pl.BlockSpec((2, HWp), lambda n: (0, 0)),
        ],
        out_specs=pl.BlockSpec((1, Cin + K, HWp), lambda n: (n, 0, 0)),
    )

    out_flat = pl.pallas_call(
        kernel,
        out_shape=jax.ShapeDtypeStruct((N, Cin + K, HWp), jnp.float32),
        grid_spec=grid_spec,
        compiler_params=pltpu.CompilerParams(
            dimension_semantics=("parallel",),          # batch axis feeds both v7x TCs (N>=2)
            vmem_limit_bytes=64 * 1024 * 1024),
    )(x_flat, w1_mat, w2_taps, colmask)

    out_flat = out_flat[:, :, :HW]
    return out_flat.reshape(N, Cin + K, H, W)


def bottleneck_reference(x, w1, w2):
    """Pure-JAX reference mirroring the PyTorch module (NCHW)."""
    def inorm(v):
        m = jnp.mean(v, axis=(2, 3), keepdims=True)
        var = jnp.mean((v - m) ** 2, axis=(2, 3), keepdims=True)
        return (v - m) * lax.rsqrt(var + EPS)

    dn = ("NCHW", "OIHW", "NCHW")
    h = jax.nn.relu(inorm(x))
    h = lax.conv_general_dilated(h, w1, (1, 1), "VALID", dimension_numbers=dn)
    h = jax.nn.relu(inorm(h))
    h = lax.conv_general_dilated(h, w2, (1, 1), ((1, 1), (1, 1)), dimension_numbers=dn)
    return jnp.concatenate([x, h], axis=1)


if __name__ == "__main__":
    # Small deterministic setup: batch=2, inChannels=4, k=4 (=> 4k=16), spatial 16x16
    N, Cin, H, W = 2, 4, 16, 16
    k = 4
    Cmid = 4 * k

    key = jax.random.PRNGKey(0)
    kx, k1, k2 = jax.random.split(key, 3)
    x = jax.random.normal(kx, (N, Cin, H, W), jnp.float32)
    w1 = jax.random.normal(k1, (Cmid, Cin, 1, 1), jnp.float32) * 0.1   # conv1 weight (OIHW)
    w2 = jax.random.normal(k2, (k, Cmid, 3, 3), jnp.float32) * 0.1     # conv2 weight (OIHW)

    out = bottleneck_forward(x, w1, w2)
    out = jax.block_until_ready(out)

    ref = jax.block_until_ready(bottleneck_reference(x, w1, w2))
    assert out.shape == (N, Cin + k, H, W), out.shape
    assert jnp.allclose(out, ref, rtol=1e-4, atol=1e-4), float(jnp.max(jnp.abs(out - ref)))

    print("KERNEL_OK")
</pallas_src>

<mosaic_0001>
module attributes {stable_mosaic.version = 11 : i64} {
  func.func @_bottleneck_kernel(%arg0: i32, %arg1: memref<1x4x256xf32, #tpu.memory_space<vmem>>, %arg2: memref<16x4xf32, #tpu.memory_space<vmem>>, %arg3: memref<9x4x16xf32, #tpu.memory_space<vmem>>, %arg4: memref<2x256xf32, #tpu.memory_space<vmem>>, %arg5: memref<1x8x256xf32, #tpu.memory_space<vmem>>) attributes {dimension_semantics = [#tpu.dimension_semantics<parallel>], iteration_bounds = array<i64: 2>, scalar_prefetch = 0 : i64, scratch_operands = 0 : i64, tpu.core_type = #tpu.core_type<tc>, window_params = [{transform_indices = @transform_0, window_bounds = array<i64: 1, 4, 256>}, {pipeline_mode = #tpu.pipeline_mode<synchronous>, transform_indices = @transform_1, window_bounds = array<i64: 16, 4>}, {pipeline_mode = #tpu.pipeline_mode<synchronous>, transform_indices = @transform_2, window_bounds = array<i64: 9, 4, 16>}, {pipeline_mode = #tpu.pipeline_mode<synchronous>, transform_indices = @transform_3, window_bounds = array<i64: 2, 256>}, {transform_indices = @transform_4, window_bounds = array<i64: 1, 8, 256>}]} {
    %c0 = arith.constant 0 : index
    %c0_0 = arith.constant 0 : index
    %c0_1 = arith.constant 0 : index
    %0 = vector.load %arg1[%c0, %c0_0, %c0_1] : memref<1x4x256xf32, #tpu.memory_space<vmem>>, vector<1x4x256xf32>
    %1 = vector.shape_cast %0 : vector<1x4x256xf32> to vector<4x256xf32>
    %2 = tpu.iota {dimensions = array<i32: 1>} : vector<1x256xi32>
    %cst = arith.constant dense<0.000000e+00> : vector<4xf32>
    %3 = vector.multi_reduction <add>, %1, %cst [1] : vector<4x256xf32> to vector<4xf32>
    %4 = vector.shape_cast %3 : vector<4xf32> to vector<4x1xf32>
    %cst_2 = arith.constant 3.906250e-03 : f32
    %5 = vector.broadcast %cst_2 : f32 to vector<4x1xf32>
    %6 = arith.mulf %4, %5 : vector<4x1xf32>
    %7 = arith.mulf %1, %1 : vector<4x256xf32>
    %cst_3 = arith.constant dense<0.000000e+00> : vector<4xf32>
    %8 = vector.multi_reduction <add>, %7, %cst_3 [1] : vector<4x256xf32> to vector<4xf32>
    %9 = vector.shape_cast %8 : vector<4xf32> to vector<4x1xf32>
    %cst_4 = arith.constant 3.906250e-03 : f32
    %10 = vector.broadcast %cst_4 : f32 to vector<4x1xf32>
    %11 = arith.mulf %9, %10 : vector<4x1xf32>
    %12 = arith.mulf %6, %6 : vector<4x1xf32>
    %13 = arith.subf %11, %12 : vector<4x1xf32>
    %cst_5 = arith.constant 0.000000e+00 : f32
    %14 = vector.broadcast %cst_5 : f32 to vector<4x1xf32>
    %15 = arith.maximumf %13, %14 : vector<4x1xf32>
    %16 = vector.broadcast %6 : vector<4x1xf32> to vector<4x256xf32>
    %17 = arith.subf %1, %16 : vector<4x256xf32>
    %cst_6 = arith.constant 9.99999974E-6 : f32
    %18 = vector.broadcast %cst_6 : f32 to vector<4x1xf32>
    %19 = arith.addf %15, %18 : vector<4x1xf32>
    %20 = math.rsqrt %19 : vector<4x1xf32>
    %21 = vector.broadcast %20 : vector<4x1xf32> to vector<4x256xf32>
    %22 = arith.mulf %17, %21 : vector<4x256xf32>
    %cst_7 = arith.constant 0.000000e+00 : f32
    %23 = vector.broadcast %cst_7 : f32 to vector<4x256xf32>
    %24 = arith.maximumf %22, %23 : vector<4x256xf32>
    %c0_8 = arith.constant 0 : index
    %c0_9 = arith.constant 0 : index
    %25 = vector.load %arg2[%c0_8, %c0_9] : memref<16x4xf32, #tpu.memory_space<vmem>>, vector<16x4xf32>
    %cst_10 = arith.constant dense<0.000000e+00> : vector<16x256xf32>
    %26 = tpu.matmul %25, %24, %cst_10 {dimension_numbers = #tpu.dot_dimension_numbers<[1], [0], [0], [1], [0, 0, 1, 1], [], []>} : vector<16x4xf32>, vector<4x256xf32>, vector<16x256xf32> -> vector<16x256xf32>
    %cst_11 = arith.constant dense<0.000000e+00> : vector<16xf32>
    %27 = vector.multi_reduction <add>, %26, %cst_11 [1] : vector<16x256xf32> to vector<16xf32>
    %28 = vector.shape_cast %27 : vector<16xf32> to vector<16x1xf32>
    %cst_12 = arith.constant 3.906250e-03 : f32
    %29 = vector.broadcast %cst_12 : f32 to vector<16x1xf32>
    %30 = arith.mulf %28, %29 : vector<16x1xf32>
    %31 = arith.mulf %26, %26 : vector<16x256xf32>
    %cst_13 = arith.constant dense<0.000000e+00> : vector<16xf32>
    %32 = vector.multi_reduction <add>, %31, %cst_13 [1] : vector<16x256xf32> to vector<16xf32>
    %33 = vector.shape_cast %32 : vector<16xf32> to vector<16x1xf32>
    %cst_14 = arith.constant 3.906250e-03 : f32
    %34 = vector.broadcast %cst_14 : f32 to vector<16x1xf32>
    %35 = arith.mulf %33, %34 : vector<16x1xf32>
    %36 = arith.mulf %30, %30 : vector<16x1xf32>
    %37 = arith.subf %35, %36 : vector<16x1xf32>
    %cst_15 = arith.constant 0.000000e+00 : f32
    %38 = vector.broadcast %cst_15 : f32 to vector<16x1xf32>
    %39 = arith.maximumf %37, %38 : vector<16x1xf32>
    %40 = vector.broadcast %30 : vector<16x1xf32> to vector<16x256xf32>
    %41 = arith.subf %26, %40 : vector<16x256xf32>
    %cst_16 = arith.constant 9.99999974E-6 : f32
    %42 = vector.broadcast %cst_16 : f32 to vector<16x1xf32>
    %43 = arith.addf %39, %42 : vector<16x1xf32>
    %44 = math.rsqrt %43 : vector<16x1xf32>
    %45 = vector.broadcast %44 : vector<16x1xf32> to vector<16x256xf32>
    %46 = arith.mulf %41, %45 : vector<16x256xf32>
    %cst_17 = arith.constant 0.000000e+00 : f32
    %47 = vector.broadcast %cst_17 : f32 to vector<16x256xf32>
    %48 = arith.maximumf %46, %47 : vector<16x256xf32>
    %c0_18 = arith.constant 0 : index
    %c0_19 = arith.constant 0 : index
    %c0_20 = arith.constant 0 : index
    %49 = vector.load %arg3[%c0_18, %c0_19, %c0_20] : memref<9x4x16xf32, #tpu.memory_space<vmem>>, vector<9x4x16xf32>
    %c0_21 = arith.constant 0 : index
    %c0_22 = arith.constant 0 : index
    %50 = vector.load %arg4[%c0_21, %c0_22] : memref<2x256xf32, #tpu.memory_space<vmem>>, vector<2x256xf32>
    %cst_23 = arith.constant 0.000000e+00 : f32
    %51 = vector.broadcast %cst_23 : f32 to vector<4x256xf32>
    %c-16_i32 = arith.constant -16 : i32
    %52 = vector.broadcast %c-16_i32 : i32 to vector<1x256xi32>
    %53 = arith.addi %2, %52 : vector<1x256xi32>
    %c0_i32 = arith.constant 0 : i32
    %54 = vector.broadcast %c0_i32 : i32 to vector<1x256xi32>
    %55 = arith.cmpi sge, %53, %54 : vector<1x256xi32>
    %c256_i32 = arith.constant 256 : i32
    %56 = vector.broadcast %c256_i32 : i32 to vector<1x256xi32>
    %57 = arith.cmpi slt, %53, %56 : vector<1x256xi32>
    %58 = arith.andi %55, %57 : vector<1x256xi1>
    %59 = arith.extui %58 : vector<1x256xi1> to vector<1x256xi32>
    %60 = arith.sitofp %59 : vector<1x256xi32> to vector<1x256xf32>
    %c17_i32 = arith.constant 17 : i32
    %61 = tpu.dynamic_rotate %48 by %c17_i32 dim 1 : vector<16x256xf32>, i32 -> vector<16x256xf32>
    %62 = vector.extract_strided_slice %49 {offsets = [0, 0, 0], sizes = [1, 4, 16], strides = [1, 1, 1]} : vector<9x4x16xf32> to vector<1x4x16xf32>
    %63 = vector.shape_cast %62 : vector<1x4x16xf32> to vector<4x16xf32>
    %cst_24 = arith.constant dense<0.000000e+00> : vector<4x256xf32>
    %64 = tpu.matmul %63, %61, %cst_24 {dimension_numbers = #tpu.dot_dimension_numbers<[1], [0], [0], [1], [0, 0, 1, 1], [], []>} : vector<4x16xf32>, vector<16x256xf32>, vector<4x256xf32> -> vector<4x256xf32>
    %65 = vector.extract_strided_slice %50 {offsets = [0, 0], sizes = [1, 256], strides = [1, 1]} : vector<2x256xf32> to vector<1x256xf32>
    %66 = arith.mulf %60, %65 : vector<1x256xf32>
    %67 = vector.broadcast %66 : vector<1x256xf32> to vector<4x256xf32>
    %68 = arith.mulf %64, %67 : vector<4x256xf32>
    %69 = arith.addf %51, %68 : vector<4x256xf32>
    %c16_i32 = arith.constant 16 : i32
    %70 = tpu.dynamic_rotate %48 by %c16_i32 dim 1 : vector<16x256xf32>, i32 -> vector<16x256xf32>
    %71 = vector.extract_strided_slice %49 {offsets = [1, 0, 0], sizes = [1, 4, 16], strides = [1, 1, 1]} : vector<9x4x16xf32> to vector<1x4x16xf32>
    %72 = vector.shape_cast %71 : vector<1x4x16xf32> to vector<4x16xf32>
    %cst_25 = arith.constant dense<0.000000e+00> : vector<4x256xf32>
    %73 = tpu.matmul %72, %70, %cst_25 {dimension_numbers = #tpu.dot_dimension_numbers<[1], [0], [0], [1], [0, 0, 1, 1], [], []>} : vector<4x16xf32>, vector<16x256xf32>, vector<4x256xf32> -> vector<4x256xf32>
    %74 = vector.broadcast %60 : vector<1x256xf32> to vector<4x256xf32>
    %75 = arith.mulf %73, %74 : vector<4x256xf32>
    %76 = arith.addf %69, %75 : vector<4x256xf32>
    %c15_i32 = arith.constant 15 : i32
    %77 = tpu.dynamic_rotate %48 by %c15_i32 dim 1 : vector<16x256xf32>, i32 -> vector<16x256xf32>
    %78 = vector.extract_strided_slice %49 {offsets = [2, 0, 0], sizes = [1, 4, 16], strides = [1, 1, 1]} : vector<9x4x16xf32> to vector<1x4x16xf32>
    %79 = vector.shape_cast %78 : vector<1x4x16xf32> to vector<4x16xf32>
    %cst_26 = arith.constant dense<0.000000e+00> : vector<4x256xf32>
    %80 = tpu.matmul %79, %77, %cst_26 {dimension_numbers = #tpu.dot_dimension_numbers<[1], [0], [0], [1], [0, 0, 1, 1], [], []>} : vector<4x16xf32>, vector<16x256xf32>, vector<4x256xf32> -> vector<4x256xf32>
    %81 = vector.extract_strided_slice %50 {offsets = [1, 0], sizes = [1, 256], strides = [1, 1]} : vector<2x256xf32> to vector<1x256xf32>
    %82 = arith.mulf %60, %81 : vector<1x256xf32>
    %83 = vector.broadcast %82 : vector<1x256xf32> to vector<4x256xf32>
    %84 = arith.mulf %80, %83 : vector<4x256xf32>
    %85 = arith.addf %76, %84 : vector<4x256xf32>
    %c1_i32 = arith.constant 1 : i32
    %86 = tpu.dynamic_rotate %48 by %c1_i32 dim 1 : vector<16x256xf32>, i32 -> vector<16x256xf32>
    %87 = vector.extract_strided_slice %49 {offsets = [3, 0, 0], sizes = [1, 4, 16], strides = [1, 1, 1]} : vector<9x4x16xf32> to vector<1x4x16xf32>
    %88 = vector.shape_cast %87 : vector<1x4x16xf32> to vector<4x16xf32>
    %cst_27 = arith.constant dense<0.000000e+00> : vector<4x256xf32>
    %89 = tpu.matmul %88, %86, %cst_27 {dimension_numbers = #tpu.dot_dimension_numbers<[1], [0], [0], [1], [0, 0, 1, 1], [], []>} : vector<4x16xf32>, vector<16x256xf32>, vector<4x256xf32> -> vector<4x256xf32>
    %90 = vector.extract_strided_slice %50 {offsets = [0, 0], sizes = [1, 256], strides = [1, 1]} : vector<2x256xf32> to vector<1x256xf32>
    %91 = vector.broadcast %90 : vector<1x256xf32> to vector<4x256xf32>
    %92 = arith.mulf %89, %91 : vector<4x256xf32>
    %93 = arith.addf %85, %92 : vector<4x256xf32>
    %94 = vector.extract_strided_slice %49 {offsets = [4, 0, 0], sizes = [1, 4, 16], strides = [1, 1, 1]} : vector<9x4x16xf32> to vector<1x4x16xf32>
    %95 = vector.shape_cast %94 : vector<1x4x16xf32> to vector<4x16xf32>
    %cst_28 = arith.constant dense<0.000000e+00> : vector<4x256xf32>
    %96 = tpu.matmul %95, %48, %cst_28 {dimension_numbers = #tpu.dot_dimension_numbers<[1], [0], [0], [1], [0, 0, 1, 1], [], []>} : vector<4x16xf32>, vector<16x256xf32>, vector<4x256xf32> -> vector<4x256xf32>
    %97 = arith.addf %93, %96 : vector<4x256xf32>
    %c255_i32 = arith.constant 255 : i32
    %98 = tpu.dynamic_rotate %48 by %c255_i32 dim 1 : vector<16x256xf32>, i32 -> vector<16x256xf32>
    %99 = vector.extract_strided_slice %49 {offsets = [5, 0, 0], sizes = [1, 4, 16], strides = [1, 1, 1]} : vector<9x4x16xf32> to vector<1x4x16xf32>
    %100 = vector.shape_cast %99 : vector<1x4x16xf32> to vector<4x16xf32>
    %cst_29 = arith.constant dense<0.000000e+00> : vector<4x256xf32>
    %101 = tpu.matmul %100, %98, %cst_29 {dimension_numbers = #tpu.dot_dimension_numbers<[1], [0], [0], [1], [0, 0, 1, 1], [], []>} : vector<4x16xf32>, vector<16x256xf32>, vector<4x256xf32> -> vector<4x256xf32>
    %102 = vector.extract_strided_slice %50 {offsets = [1, 0], sizes = [1, 256], strides = [1, 1]} : vector<2x256xf32> to vector<1x256xf32>
    %103 = vector.broadcast %102 : vector<1x256xf32> to vector<4x256xf32>
    %104 = arith.mulf %101, %103 : vector<4x256xf32>
    %105 = arith.addf %97, %104 : vector<4x256xf32>
    %c16_i32_30 = arith.constant 16 : i32
    %106 = vector.broadcast %c16_i32_30 : i32 to vector<1x256xi32>
    %107 = arith.addi %2, %106 : vector<1x256xi32>
    %c0_i32_31 = arith.constant 0 : i32
    %108 = vector.broadcast %c0_i32_31 : i32 to vector<1x256xi32>
    %109 = arith.cmpi sge, %107, %108 : vector<1x256xi32>
    %c256_i32_32 = arith.constant 256 : i32
    %110 = vector.broadcast %c256_i32_32 : i32 to vector<1x256xi32>
    %111 = arith.cmpi slt, %107, %110 : vector<1x256xi32>
    %112 = arith.andi %109, %111 : vector<1x256xi1>
    %113 = arith.extui %112 : vector<1x256xi1> to vector<1x256xi32>
    %114 = arith.sitofp %113 : vector<1x256xi32> to vector<1x256xf32>
    %c241_i32 = arith.constant 241 : i32
    %115 = tpu.dynamic_rotate %48 by %c241_i32 dim 1 : vector<16x256xf32>, i32 -> vector<16x256xf32>
    %116 = vector.extract_strided_slice %49 {offsets = [6, 0, 0], sizes = [1, 4, 16], strides = [1, 1, 1]} : vector<9x4x16xf32> to vector<1x4x16xf32>
    %117 = vector.shape_cast %116 : vector<1x4x16xf32> to vector<4x16xf32>
    %cst_33 = arith.constant dense<0.000000e+00> : vector<4x256xf32>
    %118 = tpu.matmul %117, %115, %cst_33 {dimension_numbers = #tpu.dot_dimension_numbers<[1], [0], [0], [1], [0, 0, 1, 1], [], []>} : vector<4x16xf32>, vector<16x256xf32>, vector<4x256xf32> -> vector<4x256xf32>
    %119 = vector.extract_strided_slice %50 {offsets = [0, 0], sizes = [1, 256], strides = [1, 1]} : vector<2x256xf32> to vector<1x256xf32>
    %120 = arith.mulf %114, %119 : vector<1x256xf32>
    %121 = vector.broadcast %120 : vector<1x256xf32> to vector<4x256xf32>
    %122 = arith.mulf %118, %121 : vector<4x256xf32>
    %123 = arith.addf %105, %122 : vector<4x256xf32>
    %c240_i32 = arith.constant 240 : i32
    %124 = tpu.dynamic_rotate %48 by %c240_i32 dim 1 : vector<16x256xf32>, i32 -> vector<16x256xf32>
    %125 = vector.extract_strided_slice %49 {offsets = [7, 0, 0], sizes = [1, 4, 16], strides = [1, 1, 1]} : vector<9x4x16xf32> to vector<1x4x16xf32>
    %126 = vector.shape_cast %125 : vector<1x4x16xf32> to vector<4x16xf32>
    %cst_34 = arith.constant dense<0.000000e+00> : vector<4x256xf32>
    %127 = tpu.matmul %126, %124, %cst_34 {dimension_numbers = #tpu.dot_dimension_numbers<[1], [0], [0], [1], [0, 0, 1, 1], [], []>} : vector<4x16xf32>, vector<16x256xf32>, vector<4x256xf32> -> vector<4x256xf32>
    %128 = vector.broadcast %114 : vector<1x256xf32> to vector<4x256xf32>
    %129 = arith.mulf %127, %128 : vector<4x256xf32>
    %130 = arith.addf %123, %129 : vector<4x256xf32>
    %c239_i32 = arith.constant 239 : i32
    %131 = tpu.dynamic_rotate %48 by %c239_i32 dim 1 : vector<16x256xf32>, i32 -> vector<16x256xf32>
    %132 = vector.extract_strided_slice %49 {offsets = [8, 0, 0], sizes = [1, 4, 16], strides = [1, 1, 1]} : vector<9x4x16xf32> to vector<1x4x16xf32>
    %133 = vector.shape_cast %132 : vector<1x4x16xf32> to vector<4x16xf32>
    %cst_35 = arith.constant dense<0.000000e+00> : vector<4x256xf32>
    %134 = tpu.matmul %133, %131, %cst_35 {dimension_numbers = #tpu.dot_dimension_numbers<[1], [0], [0], [1], [0, 0, 1, 1], [], []>} : vector<4x16xf32>, vector<16x256xf32>, vector<4x256xf32> -> vector<4x256xf32>
    %135 = vector.extract_strided_slice %50 {offsets = [1, 0], sizes = [1, 256], strides = [1, 1]} : vector<2x256xf32> to vector<1x256xf32>
    %136 = arith.mulf %114, %135 : vector<1x256xf32>
    %137 = vector.broadcast %136 : vector<1x256xf32> to vector<4x256xf32>
    %138 = arith.mulf %134, %137 : vector<4x256xf32>
    %139 = arith.addf %130, %138 : vector<4x256xf32>
    %c0_36 = arith.constant 0 : index
    %c0_37 = arith.constant 0 : index
    %c0_38 = arith.constant 0 : index
    %140 = vector.load %arg5[%c0_36, %c0_37, %c0_38] : memref<1x8x256xf32, #tpu.memory_space<vmem>>, vector<1x4x256xf32>
    %141 = vector.shape_cast %140 : vector<1x4x256xf32> to vector<4x256xf32>
    %142 = vector.shape_cast %1 : vector<4x256xf32> to vector<1x4x256xf32>
    tpu.vector_store %arg5[%c0_36, %c0_37, %c0_38], %142 {strides = array<i32>} : memref<1x8x256xf32, #tpu.memory_space<vmem>>, vector<1x4x256xf32>,
    %c0_39 = arith.constant 0 : index
    %c4 = arith.constant 4 : index
    %c0_40 = arith.constant 0 : index
    %143 = vector.load %arg5[%c0_39, %c4, %c0_40] : memref<1x8x256xf32, #tpu.memory_space<vmem>>, vector<1x4x256xf32>
    %144 = vector.shape_cast %143 : vector<1x4x256xf32> to vector<4x256xf32>
    %145 = vector.shape_cast %139 : vector<4x256xf32> to vector<1x4x256xf32>
    tpu.vector_store %arg5[%c0_39, %c4, %c0_40], %145 {strides = array<i32>} : memref<1x8x256xf32, #tpu.memory_space<vmem>>, vector<1x4x256xf32>,
    return
  }
  func.func @transform_0(%arg0: i32) -> (i32, i32, i32) {
    %c0_i32 = arith.constant 0 : i32
    %c0_i32_0 = arith.constant 0 : i32
    %c0_i32_1 = arith.constant 0 : i32
    return %arg0, %c0_i32, %c0_i32_0 : i32, i32, i32
  }
  func.func @transform_1(%arg0: i32) -> (i32, i32) {
    %c0_i32 = arith.constant 0 : i32
    %c0_i32_0 = arith.constant 0 : i32
    %c0_i32_1 = arith.constant 0 : i32
    return %c0_i32, %c0_i32_0 : i32, i32
  }
  func.func @transform_2(%arg0: i32) -> (i32, i32, i32) {
    %c0_i32 = arith.constant 0 : i32
    %c0_i32_0 = arith.constant 0 : i32
    %c0_i32_1 = arith.constant 0 : i32
    %c0_i32_2 = arith.constant 0 : i32
    return %c0_i32, %c0_i32_0, %c0_i32_1 : i32, i32, i32
  }
  func.func @transform_3(%arg0: i32) -> (i32, i32) {
    %c0_i32 = arith.constant 0 : i32
    %c0_i32_0 = arith.constant 0 : i32
    %c0_i32_1 = arith.constant 0 : i32
    return %c0_i32, %c0_i32_0 : i32, i32
  }
  func.func @transform_4(%arg0: i32) -> (i32, i32, i32) {
    %c0_i32 = arith.constant 0 : i32
    %c0_i32_0 = arith.constant 0 : i32
    %c0_i32_1 = arith.constant 0 : i32
    return %arg0, %c0_i32, %c0_i32_0 : i32, i32, i32
  }
}

</mosaic_0001>

<llo_original>
// kernel: tpu_custom_call.1
$region0: #{tpu_custom_call.1}
  #allocation0 [shape = 'u32[]', space=smem, size = 0x4, offset = 0x4, fixed_abs, tag = 'smem constant byte address 0x4 - core index']
  #allocation1 [shape = 'u32[144,128]{1,0:T(1,128)}', space=vmem, size = 0x12000, scoped, tag = 'internal scratch']
  %s0 = inlined_call_operand.vmem [shape: f32[2,4,256], index: 0, kind: input, shape index: {}]
  %s1 = inlined_call_operand.vmem [shape: f32[16,4], index: 1, kind: input, shape index: {}]
  %s2 = inlined_call_operand.hbm [shape: f32[9,4,16], index: 2, kind: input, shape index: {}]
  %s3 = inlined_call_operand.vmem [shape: f32[2,256], index: 3, kind: input, shape index: {}]
  %s4 = inlined_call_operand.hbm [shape: f32[2,8,256], index: 4, kind: output, shape index: {}]
  %s5 = sld [smem:[#allocation0]]
  $region53: #{tpu_custom_call.1} parent=0
    _
  %s7 = ssub.s32 1, %s5
  %s8 = scalar_select 0, %s7, %s5
  $region1: #{tpu_custom_call.1} parent=0
    #allocation2 [shape = 'u8[18432]{0}', space=vmem, size = 0x4800, scoped, tag = 'input window, operand 2, single buffered']
    #allocation3 [shape = 's32[2]{0}', space=sflag, size = 0x8, scoped, tag = 'scoped memory for tpu_custom_call.1']
    #allocation4 [shape = 's32[2]{0}', space=sflag, size = 0x8, scoped, tag = 'scoped memory for tpu_custom_call.1']
    #allocation5 [shape = 'u8[16384]{0}', space=vmem, size = 0x4000, scoped, tag = 'output window, operand 0']
    %9 = vsyncpa [#allocation3], 0
    %10 = vsyncpa [#allocation4], 0
    %s11 = scalar_lea.sflag [#allocation4], 1
    %12 = vsyncpa %s11, 0
    loop: start=0, step=1, limit=4
    $region2: #{tpu_custom_call.1} parent=1 // loop_pre_header
      _
    $region3: #{tpu_custom_call.1} parent=1 // loop_header
      %s14 = sphi 0, %s18
      %p15 = scmp.ge.s32.totalorder %s14, 4
      %s24 = sphi 0, %s26
      %s27 = sphi 0, %s24
      %s28 = sphi 0, %s27
      %s44 = sphi 0, %s28
      %s48 = sphi 0, %s48
      %s50 = sphi 0, %s48
      %s51 = sphi 0, %s50
      %s65 = sphi 0, %s51
      %s69 = sphi 0, %s69
      %s71 = sphi 0, %s69
      %s72 = sphi 0, %s71
      %s86 = sphi 0, %s72
      %s90 = sphi 0, %s90
      %s92 = sphi 0, %s90
      %s93 = sphi 0, %s92
      %s107 = sphi 0, %s93
      %s113 = sphi 0, %s115
      %s116 = sphi 0, %s113
      %s117 = sphi 0, %s116
      %s133 = sphi 0, %s117
    $region4: #{tpu_custom_call.1} parent=1 // loop_header_branch
      %17 = sbr.rel (%p15) target = $region8
    $region5: #{tpu_custom_call.1} parent=1 // loop_body
      %s19 = ssub.s32 %s14, 1
      %s20 = ssub.s32 %s14, 2
      %s21 = sadd.s32 %s14, 1
      %s22 = ssub.s32 %s14, %s21
      %p23 = scmp.eq.s32.totalorder %s22, 0
      %s25 = sadd.s32 %s24, 1
      %s26 = scalar_select %p23, %s24, %s25
      %p29 = pneg %p23
      %p30 = scmp.eq.s32.totalorder %s14, 1
      %p31 = por %p29, %p30
      %p32 = scmp.ne.s32.totalorder %s24, %s27
      %p33 = scmp.eq.s32.totalorder %s14, 0
      %p34 = por %p32, %p33
      %p35 = scmp.ne.s32.totalorder %s24, %s27
      %p36 = scmp.eq.s32.totalorder %s19, 1
      %p37 = por %p35, %p36
      %p38 = scmp.ne.s32.totalorder %s27, %s28
      %p39 = scmp.eq.s32.totalorder %s19, 0
      %p40 = por %p38, %p39
      %p41 = scmp.ne.s32.totalorder %s27, %s28
      %p42 = scmp.eq.s32.totalorder %s20, 1
      %p43 = por %p41, %p42
      %p45 = scmp.ne.s32.totalorder %s28, %s44
      %p46 = scmp.eq.s32.totalorder %s20, 0
      %p47 = por %p45, %p46
      %s49 = sadd.s32 %s48, 1
      %p52 = scmp.eq.s32.totalorder %s14, 1
      %p53 = scmp.ne.s32.totalorder %s48, %s50
      %p54 = scmp.eq.s32.totalorder %s14, 0
      %p55 = por %p53, %p54
      %p56 = scmp.ne.s32.totalorder %s48, %s50
      %p57 = scmp.eq.s32.totalorder %s19, 1
      %p58 = por %p56, %p57
      %p59 = scmp.ne.s32.totalorder %s50, %s51
      %p60 = scmp.eq.s32.totalorder %s19, 0
      %p61 = por %p59, %p60
      %p62 = scmp.ne.s32.totalorder %s50, %s51
      %p63 = scmp.eq.s32.totalorder %s20, 1
      %p64 = por %p62, %p63
      %p66 = scmp.ne.s32.totalorder %s51, %s65
      %p67 = scmp.eq.s32.totalorder %s20, 0
      %p68 = por %p66, %p67
      %s70 = sadd.s32 %s69, 1
      %p73 = scmp.eq.s32.totalorder %s14, 1
      %p74 = scmp.ne.s32.totalorder %s69, %s71
      %p75 = scmp.eq.s32.totalorder %s14, 0
      %p76 = por %p74, %p75
      %p77 = scmp.ne.s32.totalorder %s69, %s71
      %p78 = scmp.eq.s32.totalorder %s19, 1
      %p79 = por %p77, %p78
      %p80 = scmp.ne.s32.totalorder %s71, %s72
      %p81 = scmp.eq.s32.totalorder %s19, 0
      %p82 = por %p80, %p81
      %p83 = scmp.ne.s32.totalorder %s71, %s72
      %p84 = scmp.eq.s32.totalorder %s20, 1
      %p85 = por %p83, %p84
      %p87 = scmp.ne.s32.totalorder %s72, %s86
      %p88 = scmp.eq.s32.totalorder %s20, 0
      %p89 = por %p87, %p88
      %s91 = sadd.s32 %s90, 1
      %p94 = scmp.eq.s32.totalorder %s14, 1
      %p95 = scmp.ne.s32.totalorder %s90, %s92
      %p96 = scmp.eq.s32.totalorder %s14, 0
      %p97 = por %p95, %p96
      %p98 = scmp.ne.s32.totalorder %s90, %s92
      %p99 = scmp.eq.s32.totalorder %s19, 1
      %p100 = por %p98, %p99
      %p101 = scmp.ne.s32.totalorder %s92, %s93
      %p102 = scmp.eq.s32.totalorder %s19, 0
      %p103 = por %p101, %p102
      %p104 = scmp.ne.s32.totalorder %s92, %s93
      %p105 = scmp.eq.s32.totalorder %s20, 1
      %p106 = por %p104, %p105
      %p108 = scmp.ne.s32.totalorder %s93, %s107
      %p109 = scmp.eq.s32.totalorder %s20, 0
      %p110 = por %p108, %p109
      %s111 = ssub.s32 %s14, %s21
      %p112 = scmp.eq.s32.totalorder %s111, 0
      %s114 = sadd.s32 %s113, 1
      %s115 = scalar_select %p112, %s113, %s114
      %p118 = pneg %p112
      %p119 = scmp.eq.s32.totalorder %s14, 1
      %p120 = por %p118, %p119
      %p121 = scmp.ne.s32.totalorder %s113, %s116
      %p122 = scmp.eq.s32.totalorder %s14, 0
      %p123 = por %p121, %p122
      %p124 = scmp.ne.s32.totalorder %s113, %s116
      %p125 = scmp.eq.s32.totalorder %s19, 1
      %p126 = por %p124, %p125
      %p127 = scmp.ne.s32.totalorder %s116, %s117
      %p128 = scmp.eq.s32.totalorder %s19, 0
      %p129 = por %p127, %p128
      %p130 = scmp.ne.s32.totalorder %s116, %s117
      %p131 = scmp.eq.s32.totalorder %s20, 1
      %p132 = por %p130, %p131
      %p134 = scmp.ne.s32.totalorder %s117, %s133
      %p135 = scmp.eq.s32.totalorder %s20, 0
      %p136 = por %p134, %p135
      %p137 = scmp.le.s32.totalorder 1, %s14
      %p138 = scmp.lt.s32.totalorder %s14, 3
      %p139 = pnand %p137, %p138
      %p140 = pneg %p139
      // Predicated region
      $region9: #{tpu_custom_call.1} parent=5 // pred_check
        _
      $region10: #{tpu_custom_call.1} parent=5 // pred_check_branch
        %142 = sbr.rel (%p139) target = $region12
      $region11: #{tpu_custom_call.1} parent=5 // pred_region
        %s143 = ssub.s32 %s14, 1
        // Predicated region
        $region13: #{tpu_custom_call.1} parent=11 // pred_check
          %p144 = pneg %p61
        $region14: #{tpu_custom_call.1} parent=11 // pred_check_branch
          %146 = sbr.rel (%p144) target = $region16
        $region15: #{tpu_custom_call.1} parent=11 // pred_region
          _
        $region16: #{tpu_custom_call.1} parent=11 // pred_fallthru
          _
        // Predicated region
        $region17: #{tpu_custom_call.1} parent=11 // pred_check
          %p147 = pneg %p82
        $region18: #{tpu_custom_call.1} parent=11 // pred_check_branch
          %149 = sbr.rel (%p147) target = $region20
        $region19: #{tpu_custom_call.1} parent=11 // pred_region
          %s151 = ssub.s32 576, 576
          %152 = vsyncadd [#allocation3], %s151
          %s153 = sshll.u32 [#allocation2], 4
          %s154 = int_to_ptr.vmem [resolvable:$true] %s153
          %159 = dma.hbm_to_vmem [thread:$0]  %s2, 576, %s154, [#allocation3], 64, 64, 4
        $region20: #{tpu_custom_call.1} parent=11 // pred_fallthru
          _
        // Predicated region
        $region21: #{tpu_custom_call.1} parent=11 // pred_check
          %p160 = pneg %p103
        $region22: #{tpu_custom_call.1} parent=11 // pred_check_branch
          %162 = sbr.rel (%p160) target = $region24
        $region23: #{tpu_custom_call.1} parent=11 // pred_region
          _
        $region24: #{tpu_custom_call.1} parent=11 // pred_fallthru
          _
      $region12: #{tpu_custom_call.1} parent=5 // pred_fallthru
        _
      %p163 = scmp.lt.s32.totalorder %s14, 2
      // Predicated region
      $region25: #{tpu_custom_call.1} parent=5 // pred_check
        %p164 = pneg %p163
      $region26: #{tpu_custom_call.1} parent=5 // pred_check_branch
        %166 = sbr.rel (%p164) target = $region28
      $region27: #{tpu_custom_call.1} parent=5 // pred_region
        // Predicated region
        $region29: #{tpu_custom_call.1} parent=27 // pred_check
          %p167 = pneg %p34
        $region30: #{tpu_custom_call.1} parent=27 // pred_check_branch
          %169 = sbr.rel (%p167) target = $region32
        $region31: #{tpu_custom_call.1} parent=27 // pred_region
          %p170 = scmp.lt.s32.totalorder %s14, 1
          %s171 = scalar_select %p170, %s14, 1
          %s172 = smul.addr %s171, 2
          %s173 = smul.addr %s172, 4
          %s174 = scalar_lea.vmem %s0, %s173
        $region32: #{tpu_custom_call.1} parent=27 // pred_fallthru
          _
      $region28: #{tpu_custom_call.1} parent=5 // pred_fallthru
        _
      %p175 = scmp.le.s32.totalorder 1, %s14
      %p176 = scmp.lt.s32.totalorder %s14, 3
      %p177 = pnand %p175, %p176
      %p178 = pneg %p177
      // Predicated region
      $region33: #{tpu_custom_call.1} parent=5 // pred_check
        _
      $region34: #{tpu_custom_call.1} parent=5 // pred_check_branch
        %180 = sbr.rel (%p177) target = $region36
      $region35: #{tpu_custom_call.1} parent=5 // pred_region
        %s181 = ssub.s32 %s14, 1
        // Predicated region
        $region37: #{tpu_custom_call.1} parent=35 // pred_check
          %p182 = pneg %p82
        $region38: #{tpu_custom_call.1} parent=35 // pred_check_branch
          %184 = sbr.rel (%p182) target = $region40
        $region39: #{tpu_custom_call.1} parent=35 // pred_region
          %185 = dma.done [#allocation3], 576
        $region40: #{tpu_custom_call.1} parent=35 // pred_fallthru
          _
        %p186 = scmp.lt.s32.totalorder %s19, 1
        %s187 = scalar_select %p186, %s19, 1
        %s188 = smul.addr %s187, 2
        %s189 = smul.addr %s188, 4
        %s190 = scalar_lea.vmem %s0, %s189
        %p191 = pneg %p40
        %p192 = pneg %p37
        %p193 = pneg %p61
        %p194 = pneg %p58
        %p195 = pneg %p82
        %p196 = pneg %p79
        %p197 = pneg %p103
        %p198 = pneg %p100
        %p199 = pneg %p129
        %p200 = pneg %p126
        %s201 = sand.u32 %s116, 1
        %s202 = scalar_lea.sflag [#allocation4], %s201
        %s203 = sand.u32 %s116, 1
        %s204 = smul.addr %s203, 16
        %s205 = scalar_lea.vmem [#allocation5], %s204
        %p206 = scmp.lt.s32.totalorder %s19, 1
        %s207 = scalar_select %p206, %s19, 1
        %s208 = smul.addr %s207, 2
        %s209 = smul.addr %s208, 4
        %s210 = scalar_lea.vmem %s0, %s209
        %v211 = vld [vmem:[%s210] sm:$0xff]
        %v212 = vlaneseq
        %v213 = vand.u32 %v212, 127
        %v214 = vadd.s32 %v213, 128
        %v216 = vcombine.high %v211, %v211
        %vm218 = vcmask 1043456
        %v219 = vsel %vm218, %v211, 0.0
        %v220 = vsel %vm218, %v216, 0.0
        %v221 = vadd.f32 %v219, %v220
        %222 = vadd.xlane.f32.xlu0 %v221
        %v223 = vpop.xlane.xlu0 %222
        %v224 = vmul.f32 %v223, 0.00390625
        %v225 = vmul.f32 %v211, %v211
        %v227 = vcombine.high %v225, %v225
        %v229 = vsel %vm218, %v225, 0.0
        %v230 = vsel %vm218, %v227, 0.0
        %v231 = vadd.f32 %v229, %v230
        %232 = vadd.xlane.f32.xlu0 %v231
        %v233 = vpop.xlane.xlu0 %232
        %v234 = vmul.f32 %v233, 0.00390625
        %v235 = vmul.f32 %v224, %v224
        %v236 = vsub.f32 %v234, %v235
        %v237 = vmax.f32 %v236, 0.0
        %v240 = vunpack.c.l.s4 839922192
        %v241 = vunpack.c.0.s8 %v240
        %v242 = vlaneseq
        %v243 = vshrl.u32 %v242, 7
        %v244 = vsub.s32 %v241, %v243
        %v245 = vrot.slane %v224, %v244
        %v247 = vsub.f32 %v211, %v245
        %v248 = vadd.f32 %v237, 1e-05
        %v249 = vrsqrt.pop %v248
        %v252 = vunpack.c.l.s4 839922192
        %v253 = vunpack.c.0.s8 %v252
        %v254 = vlaneseq
        %v255 = vshrl.u32 %v254, 7
        %v256 = vsub.s32 %v253, %v255
        %v257 = vrot.slane %v249, %v256
        %v259 = vmul.f32 %v247, %v257
        %v260 = vmax.f32 %v259, 0.0
        %v261 = vld [vmem:[%s1] sm:$0xff]
        %v262 = vld [vmem:[%s1 + $0x8] sm:$0xff]
        %v264 = vcombine.high %v260, %v260
        %vm265 = vcmask 31744
        %v267 = vsel %vm265, %v261, 0
        %v270 = vsel %vm265, %v262, 0
        %v272 = vsel %vm218, %v260, 0
        %v274 = vsel %vm218, %v264, 0
        %276 = vmatprep.subr.mxu0 0.0
        %277 = vmatpush1.msra.mxu0 0.0
        %278 = vmatprep.subr.mxu0 0.0
        %279 = vmatpush1.msra.mxu0 0.0
        %280 = vmatprep.subr.mxu0 0.0
        %281 = vmatpush1.msra.mxu0 0.0
        %282 = vmatprep.subr.mxu0 0.0
        %283 = vmatpush1.msra.mxu0 0.0
        %284 = vmatprep.subr.mxu0 0.0
        %285 = vmatpush1.msra.mxu0 0.0
        %286 = vmatprep.subr.mxu0 0.0
        %287 = vmatpush1.msra.mxu0 0.0
        %288 = vmatprep.subr.mxu0 0.0
        %289 = vmatpush1.msra.mxu0 0.0
        %290 = vmatprep.subr.mxu0 0.0
        %291 = vmatpush1.msra.mxu0 0.0
        %292 = vmatprep.subr.mxu0 0.0
        %293 = vmatpush1.msra.mxu0 0.0
        %294 = vmatprep.subr.mxu0 0.0
        %295 = vmatpush1.msra.mxu0 0.0
        %296 = vmatprep.subr.mxu0 0.0
        %297 = vmatpush1.msra.mxu0 0.0
        %298 = vmatprep.subr.mxu0 0.0
        %299 = vmatpush1.msra.mxu0 0.0
        %300 = vmatprep.subr.mxu0 0.0
        %301 = vmatpush1.msra.mxu0 0.0
        %302 = vmatprep.subr.mxu0 0.0
        %303 = vmatpush1.msra.mxu0 0.0
        %304 = vmatprep.subr.mxu0 0.0
        %305 = vmatpush1.msra.mxu0 0.0
        %306 = vmatprep.subr.mxu0 %v274
        %307 = vmatpush1.msra.mxu0 %v272
        %308 = vmatprep.subr.mxu0 0.0
        %309 = vmatpush2.msra.mxu0 0.0
        %310 = vmatprep.subr.mxu0 0.0
        %311 = vmatpush2.msra.mxu0 0.0
        %312 = vmatprep.subr.mxu0 0.0
        %313 = vmatpush2.msra.mxu0 0.0
        %314 = vmatprep.subr.mxu0 0.0
        %315 = vmatpush2.msra.mxu0 0.0
        %316 = vmatprep.subr.mxu0 0.0
        %317 = vmatpush2.msra.mxu0 0.0
        %318 = vmatprep.subr.mxu0 0.0
        %319 = vmatpush2.msra.mxu0 0.0
        %320 = vmatprep.subr.mxu0 0.0
        %321 = vmatpush2.msra.mxu0 0.0
        %322 = vmatprep.subr.mxu0 0.0
        %323 = vmatpush2.msra.mxu0 0.0
        %324 = vmatprep.subr.mxu0 0.0
        %325 = vmatpush2.msra.mxu0 0.0
        %326 = vmatprep.subr.mxu0 0.0
        %327 = vmatpush2.msra.mxu0 0.0
        %328 = vmatprep.subr.mxu0 0.0
        %329 = vmatpush2.msra.mxu0 0.0
        %330 = vmatprep.subr.mxu0 0.0
        %331 = vmatpush2.msra.mxu0 0.0
        %332 = vmatprep.subr.mxu0 0.0
        %333 = vmatpush2.msra.mxu0 0.0
        %334 = vmatprep.subr.mxu0 0.0
        %335 = vmatpush2.msra.mxu0 0.0
        %336 = vmatprep.subr.mxu0 0.0
        %337 = vmatpush2.msra.mxu0 0.0
        %338 = vmatprep.subr.mxu0 0.0
        %339 = vmatpush2.msra.mxu0 0.0
        %340 = vmatprep.mubr.f32.mxu0 0.0
        %341 = vmatmul.mubr.f32.gmra.mxu0 %v267
        %v342 = vpop.f32.mrf.mxu0
        %v343 = vadd.f32 0.0, %v342
        %v344 = vpop.f32.mrf.mxu0
        %v345 = vadd.f32 0.0, %v344
        %346 = vmatprep.mubr.f32.mxu0 0.0
        %347 = vmatmul.mubr.f32.gmra.mxu0 %v270
        %v348 = vpop.f32.mrf.mxu0
        %v349 = vadd.f32 0.0, %v348
        %v350 = vpop.f32.mrf.mxu0
        %v351 = vadd.f32 0.0, %v350
        %352 = vdwg.mxu0
        %v353 = vadd.f32 %v343, %v345
        %354 = vadd.xlane.f32.xlu0 %v353
        %v355 = vpop.xlane.xlu0 %354
        %v356 = vadd.f32 %v349, %v351
        %357 = vadd.xlane.f32.xlu0 %v356
        %v358 = vpop.xlane.xlu0 %357
        %v359 = vmul.f32 %v355, 0.00390625
        %v360 = vmul.f32 %v358, 0.00390625
        %v361 = vmul.f32 %v343, %v343
        %v362 = vmul.f32 %v345, %v345
        %v363 = vmul.f32 %v349, %v349
        %v364 = vmul.f32 %v351, %v351
        %v365 = vadd.f32 %v361, %v362
        %366 = vadd.xlane.f32.xlu0 %v365
        %v367 = vpop.xlane.xlu0 %366
        %v368 = vadd.f32 %v363, %v364
        %369 = vadd.xlane.f32.xlu0 %v368
        %v370 = vpop.xlane.xlu0 %369
        %v371 = vmul.f32 %v367, 0.00390625
        %v372 = vmul.f32 %v370, 0.00390625
        %v373 = vmul.f32 %v359, %v359
        %v374 = vmul.f32 %v360, %v360
        %v375 = vsub.f32 %v371, %v373
        %v376 = vsub.f32 %v372, %v374
        %v377 = vmax.f32 %v375, 0.0
        %v378 = vmax.f32 %v376, 0.0
        %v379 = vsub.f32 %v343, %v359
        %v380 = vsub.f32 %v345, %v359
        %v381 = vsub.f32 %v349, %v360
        %v382 = vsub.f32 %v351, %v360
        %v383 = vadd.f32 %v377, 1e-05
        %v384 = vadd.f32 %v378, 1e-05
        %v385 = vrsqrt.pop %v383
        %v386 = vrsqrt.pop %v384
        %v387 = vmul.f32 %v379, %v385
        %v388 = vmul.f32 %v380, %v385
        %v389 = vmul.f32 %v381, %v386
        %v390 = vmul.f32 %v382, %v386
        %v391 = vmax.f32 %v387, 0.0
        %v392 = vmax.f32 %v388, 0.0
        %v393 = vmax.f32 %v389, 0.0
        %v394 = vmax.f32 %v390, 0.0
        %v395 = vld [vmem:[#allocation2] sm:$0xf]
        %v396 = vld [vmem:[#allocation2 + $0x4] sm:$0xf]
        %v397 = vld [vmem:[#allocation2 + $0x8] sm:$0xf]
        %v398 = vld [vmem:[#allocation2 + $0xc] sm:$0xf]
        %v399 = vld [vmem:[#allocation2 + $0x10] sm:$0xf]
        %v400 = vld [vmem:[#allocation2 + $0x14] sm:$0xf]
        %v401 = vld [vmem:[#allocation2 + $0x18] sm:$0xf]
        %v402 = vld [vmem:[#allocation2 + $0x1c] sm:$0xf]
        %v403 = vld [vmem:[#allocation2 + $0x20] sm:$0xf]
        %v404 = vld [vmem:[%s3] sm:$0xf]
        %v405 = vadd.s32 %v213, 4294967280
        %v406 = vadd.s32 %v214, 4294967280
        %vm407 = vcmp.ge.s32.totalorder %v405, 0
        %vm408 = vcmp.ge.s32.totalorder %v406, 0
        %vm409 = vcmp.lt.s32.totalorder %v405, 256
        %vm410 = vcmp.lt.s32.totalorder %v406, 256
        %vm411 = vmand %vm407, %vm409
        %vm412 = vmand %vm408, %vm410
        %v413 = vsel %vm411, 1, 0
        %v414 = vsel %vm412, 1, 0
        %v415 = vcvt.s32.f32 %v413
        %v416 = vcvt.s32.f32 %v414
        %417 = vrot.lane.b32.xlu0 %v391, 17
        %v418 = vpop.permute.xlu0 %417
        %419 = vrot.lane.b32.xlu0 %v393, 17
        %v420 = vpop.permute.xlu0 %419
        %421 = vrot.lane.b32.xlu0 %v392, 17
        %v422 = vpop.permute.xlu0 %421
        %423 = vrot.lane.b32.xlu0 %v394, 17
        %v424 = vpop.permute.xlu0 %423
        %vm425 = vcmp.lt.s32.totalorder %v213, 17
        %v426 = vsel %vm425, %v418, %v422
        %v427 = vsel %vm425, %v420, %v424
        %v428 = vsel %vm425, %v422, %v418
        %v429 = vsel %vm425, %v424, %v420
        %vm430 = vcmask 130048
        %v432 = vsel %vm430, %v395, 0
        %434 = vmatprep.subr.mxu0 0.0
        %435 = vmatpush1.msra.mxu0 0.0
        %436 = vmatprep.subr.mxu0 0.0
        %437 = vmatpush1.msra.mxu0 0.0
        %438 = vmatprep.subr.mxu0 0.0
        %439 = vmatpush1.msra.mxu0 0.0
        %440 = vmatprep.subr.mxu0 0.0
        %441 = vmatpush1.msra.mxu0 0.0
        %442 = vmatprep.subr.mxu0 0.0
        %443 = vmatpush1.msra.mxu0 0.0
        %444 = vmatprep.subr.mxu0 0.0
        %445 = vmatpush1.msra.mxu0 0.0
        %446 = vmatprep.subr.mxu0 0.0
        %447 = vmatpush1.msra.mxu0 0.0
        %448 = vmatprep.subr.mxu0 0.0
        %449 = vmatpush1.msra.mxu0 0.0
        %450 = vmatprep.subr.mxu0 0.0
        %451 = vmatpush1.msra.mxu0 0.0
        %452 = vmatprep.subr.mxu0 0.0
        %453 = vmatpush1.msra.mxu0 0.0
        %454 = vmatprep.subr.mxu0 0.0
        %455 = vmatpush1.msra.mxu0 0.0
        %456 = vmatprep.subr.mxu0 0.0
        %457 = vmatpush1.msra.mxu0 0.0
        %458 = vmatprep.subr.mxu0 0.0
        %459 = vmatpush1.msra.mxu0 0.0
        %460 = vmatprep.subr.mxu0 0.0
        %461 = vmatpush1.msra.mxu0 0.0
        %462 = vmatprep.subr.mxu0 %v427
        %463 = vmatpush1.msra.mxu0 %v429
        %464 = vmatprep.subr.mxu0 %v426
        %465 = vmatpush1.msra.mxu0 %v428
        %466 = vmatprep.subr.mxu0 0.0
        %467 = vmatpush2.msra.mxu0 0.0
        %468 = vmatprep.subr.mxu0 0.0
        %469 = vmatpush2.msra.mxu0 0.0
        %470 = vmatprep.subr.mxu0 0.0
        %471 = vmatpush2.msra.mxu0 0.0
        %472 = vmatprep.subr.mxu0 0.0
        %473 = vmatpush2.msra.mxu0 0.0
        %474 = vmatprep.subr.mxu0 0.0
        %475 = vmatpush2.msra.mxu0 0.0
        %476 = vmatprep.subr.mxu0 0.0
        %477 = vmatpush2.msra.mxu0 0.0
        %478 = vmatprep.subr.mxu0 0.0
        %479 = vmatpush2.msra.mxu0 0.0
        %480 = vmatprep.subr.mxu0 0.0
        %481 = vmatpush2.msra.mxu0 0.0
        %482 = vmatprep.subr.mxu0 0.0
        %483 = vmatpush2.msra.mxu0 0.0
        %484 = vmatprep.subr.mxu0 0.0
        %485 = vmatpush2.msra.mxu0 0.0
        %486 = vmatprep.subr.mxu0 0.0
        %487 = vmatpush2.msra.mxu0 0.0
        %488 = vmatprep.subr.mxu0 0.0
        %489 = vmatpush2.msra.mxu0 0.0
        %490 = vmatprep.subr.mxu0 0.0
        %491 = vmatpush2.msra.mxu0 0.0
        %492 = vmatprep.subr.mxu0 0.0
        %493 = vmatpush2.msra.mxu0 0.0
        %494 = vmatprep.subr.mxu0 0.0
        %495 = vmatpush2.msra.mxu0 0.0
        %496 = vmatprep.subr.mxu0 0.0
        %497 = vmatpush2.msra.mxu0 0.0
        %498 = vmatprep.mubr.f32.mxu0 0.0
        %499 = vmatmul.mubr.f32.gmra.mxu0 %v432
        %v500 = vpop.f32.mrf.mxu0
        %v501 = vadd.f32 0.0, %v500
        %v502 = vpop.f32.mrf.mxu0
        %v503 = vadd.f32 0.0, %v502
        %504 = vdwg.mxu0
        %v506 = vlaneseq
        %v507 = vshrl.u32 %v506, 7
        %v508 = vsub.s32 0, %v507
        %v509 = vrot.slane %v404, %v508
        %v510 = vlaneseq
        %v511 = vshrl.u32 %v510, 7
        %v512 = vsub.s32 2, %v511
        %v513 = vrot.slane %v404, %v512
        %v516 = vmul.f32 %v415, %v509
        %v517 = vmul.f32 %v416, %v513
        %v518 = vlaneseq
        %v519 = vshrl.u32 %v518, 7
        %v520 = vsub.s32 0, %v519
        %v521 = vrot.slane %v516, %v520
        %v522 = vlaneseq
        %v523 = vshrl.u32 %v522, 7
        %v524 = vsub.s32 0, %v523
        %v525 = vrot.slane %v517, %v524
        %v526 = vmul.f32 %v501, %v521
        %v527 = vmul.f32 %v503, %v525
        %v528 = vadd.f32 %v526, 0.0
        %v529 = vadd.f32 %v527, 0.0
        %530 = vrot.lane.b32.xlu0 %v391, 16
        %v531 = vpop.permute.xlu0 %530
        %532 = vrot.lane.b32.xlu0 %v393, 16
        %v533 = vpop.permute.xlu0 %532
        %534 = vrot.lane.b32.xlu0 %v392, 16
        %v535 = vpop.permute.xlu0 %534
        %536 = vrot.lane.b32.xlu0 %v394, 16
        %v537 = vpop.permute.xlu0 %536
        %vm538 = vcmp.lt.s32.totalorder %v213, 16
        %v539 = vsel %vm538, %v531, %v535
        %v540 = vsel %vm538, %v533, %v537
        %v541 = vsel %vm538, %v535, %v531
        %v542 = vsel %vm538, %v537, %v533
        %v544 = vsel %vm430, %v396, 0
        %546 = vmatprep.subr.mxu0 0.0
        %547 = vmatpush1.msra.mxu0 0.0
        %548 = vmatprep.subr.mxu0 0.0
        %549 = vmatpush1.msra.mxu0 0.0
        %550 = vmatprep.subr.mxu0 0.0
        %551 = vmatpush1.msra.mxu0 0.0
        %552 = vmatprep.subr.mxu0 0.0
        %553 = vmatpush1.msra.mxu0 0.0
        %554 = vmatprep.subr.mxu0 0.0
        %555 = vmatpush1.msra.mxu0 0.0
        %556 = vmatprep.subr.mxu0 0.0
        %557 = vmatpush1.msra.mxu0 0.0
        %558 = vmatprep.subr.mxu0 0.0
        %559 = vmatpush1.msra.mxu0 0.0
        %560 = vmatprep.subr.mxu0 0.0
        %561 = vmatpush1.msra.mxu0 0.0
        %562 = vmatprep.subr.mxu0 0.0
        %563 = vmatpush1.msra.mxu0 0.0
        %564 = vmatprep.subr.mxu0 0.0
        %565 = vmatpush1.msra.mxu0 0.0
        %566 = vmatprep.subr.mxu0 0.0
        %567 = vmatpush1.msra.mxu0 0.0
        %568 = vmatprep.subr.mxu0 0.0
        %569 = vmatpush1.msra.mxu0 0.0
        %570 = vmatprep.subr.mxu0 0.0
        %571 = vmatpush1.msra.mxu0 0.0
        %572 = vmatprep.subr.mxu0 0.0
        %573 = vmatpush1.msra.mxu0 0.0
        %574 = vmatprep.subr.mxu0 %v540
        %575 = vmatpush1.msra.mxu0 %v542
        %576 = vmatprep.subr.mxu0 %v539
        %577 = vmatpush1.msra.mxu0 %v541
        %578 = vmatprep.subr.mxu0 0.0
        %579 = vmatpush2.msra.mxu0 0.0
        %580 = vmatprep.subr.mxu0 0.0
        %581 = vmatpush2.msra.mxu0 0.0
        %582 = vmatprep.subr.mxu0 0.0
        %583 = vmatpush2.msra.mxu0 0.0
        %584 = vmatprep.subr.mxu0 0.0
        %585 = vmatpush2.msra.mxu0 0.0
        %586 = vmatprep.subr.mxu0 0.0
        %587 = vmatpush2.msra.mxu0 0.0
        %588 = vmatprep.subr.mxu0 0.0
        %589 = vmatpush2.msra.mxu0 0.0
        %590 = vmatprep.subr.mxu0 0.0
        %591 = vmatpush2.msra.mxu0 0.0
        %592 = vmatprep.subr.mxu0 0.0
        %593 = vmatpush2.msra.mxu0 0.0
        %594 = vmatprep.subr.mxu0 0.0
        %595 = vmatpush2.msra.mxu0 0.0
        %596 = vmatprep.subr.mxu0 0.0
        %597 = vmatpush2.msra.mxu0 0.0
        %598 = vmatprep.subr.mxu0 0.0
        %599 = vmatpush2.msra.mxu0 0.0
        %600 = vmatprep.subr.mxu0 0.0
        %601 = vmatpush2.msra.mxu0 0.0
        %602 = vmatprep.subr.mxu0 0.0
        %603 = vmatpush2.msra.mxu0 0.0
        %604 = vmatprep.subr.mxu0 0.0
        %605 = vmatpush2.msra.mxu0 0.0
        %606 = vmatprep.subr.mxu0 0.0
        %607 = vmatpush2.msra.mxu0 0.0
        %608 = vmatprep.subr.mxu0 0.0
        %609 = vmatpush2.msra.mxu0 0.0
        %610 = vmatprep.mubr.f32.mxu0 0.0
        %611 = vmatmul.mubr.f32.gmra.mxu0 %v544
        %v612 = vpop.f32.mrf.mxu0
        %v613 = vadd.f32 0.0, %v612
        %v614 = vpop.f32.mrf.mxu0
        %v615 = vadd.f32 0.0, %v614
        %616 = vdwg.mxu0
        %v617 = vmul.f32 %v613, %v415
        %v618 = vmul.f32 %v615, %v416
        %v619 = vadd.f32 %v528, %v617
        %v620 = vadd.f32 %v529, %v618
        %621 = vrot.lane.b32.xlu0 %v391, 15
        %v622 = vpop.permute.xlu0 %621
        %623 = vrot.lane.b32.xlu0 %v393, 15
        %v624 = vpop.permute.xlu0 %623
        %625 = vrot.lane.b32.xlu0 %v392, 15
        %v626 = vpop.permute.xlu0 %625
        %627 = vrot.lane.b32.xlu0 %v394, 15
        %v628 = vpop.permute.xlu0 %627
        %vm629 = vcmp.lt.s32.totalorder %v213, 15
        %v630 = vsel %vm629, %v622, %v626
        %v631 = vsel %vm629, %v624, %v628
        %v632 = vsel %vm629, %v626, %v622
        %v633 = vsel %vm629, %v628, %v624
        %v635 = vsel %vm430, %v397, 0
        %637 = vmatprep.subr.mxu0 0.0
        %638 = vmatpush1.msra.mxu0 0.0
        %639 = vmatprep.subr.mxu0 0.0
        %640 = vmatpush1.msra.mxu0 0.0
        %641 = vmatprep.subr.mxu0 0.0
        %642 = vmatpush1.msra.mxu0 0.0
        %643 = vmatprep.subr.mxu0 0.0
        %644 = vmatpush1.msra.mxu0 0.0
        %645 = vmatprep.subr.mxu0 0.0
        %646 = vmatpush1.msra.mxu0 0.0
        %647 = vmatprep.subr.mxu0 0.0
        %648 = vmatpush1.msra.mxu0 0.0
        %649 = vmatprep.subr.mxu0 0.0
        %650 = vmatpush1.msra.mxu0 0.0
        %651 = vmatprep.subr.mxu0 0.0
        %652 = vmatpush1.msra.mxu0 0.0
        %653 = vmatprep.subr.mxu0 0.0
        %654 = vmatpush1.msra.mxu0 0.0
        %655 = vmatprep.subr.mxu0 0.0
        %656 = vmatpush1.msra.mxu0 0.0
        %657 = vmatprep.subr.mxu0 0.0
        %658 = vmatpush1.msra.mxu0 0.0
        %659 = vmatprep.subr.mxu0 0.0
        %660 = vmatpush1.msra.mxu0 0.0
        %661 = vmatprep.subr.mxu0 0.0
        %662 = vmatpush1.msra.mxu0 0.0
        %663 = vmatprep.subr.mxu0 0.0
        %664 = vmatpush1.msra.mxu0 0.0
        %665 = vmatprep.subr.mxu0 %v631
        %666 = vmatpush1.msra.mxu0 %v633
        %667 = vmatprep.subr.mxu0 %v630
        %668 = vmatpush1.msra.mxu0 %v632
        %669 = vmatprep.subr.mxu0 0.0
        %670 = vmatpush2.msra.mxu0 0.0
        %671 = vmatprep.subr.mxu0 0.0
        %672 = vmatpush2.msra.mxu0 0.0
        %673 = vmatprep.subr.mxu0 0.0
        %674 = vmatpush2.msra.mxu0 0.0
        %675 = vmatprep.subr.mxu0 0.0
        %676 = vmatpush2.msra.mxu0 0.0
        %677 = vmatprep.subr.mxu0 0.0
        %678 = vmatpush2.msra.mxu0 0.0
        %679 = vmatprep.subr.mxu0 0.0
        %680 = vmatpush2.msra.mxu0 0.0
        %681 = vmatprep.subr.mxu0 0.0
        %682 = vmatpush2.msra.mxu0 0.0
        %683 = vmatprep.subr.mxu0 0.0
        %684 = vmatpush2.msra.mxu0 0.0
        %685 = vmatprep.subr.mxu0 0.0
        %686 = vmatpush2.msra.mxu0 0.0
        %687 = vmatprep.subr.mxu0 0.0
        %688 = vmatpush2.msra.mxu0 0.0
        %689 = vmatprep.subr.mxu0 0.0
        %690 = vmatpush2.msra.mxu0 0.0
        %691 = vmatprep.subr.mxu0 0.0
        %692 = vmatpush2.msra.mxu0 0.0
        %693 = vmatprep.subr.mxu0 0.0
        %694 = vmatpush2.msra.mxu0 0.0
        %695 = vmatprep.subr.mxu0 0.0
        %696 = vmatpush2.msra.mxu0 0.0
        %697 = vmatprep.subr.mxu0 0.0
        %698 = vmatpush2.msra.mxu0 0.0
        %699 = vmatprep.subr.mxu0 0.0
        %700 = vmatpush2.msra.mxu0 0.0
        %701 = vmatprep.mubr.f32.mxu0 0.0
        %702 = vmatmul.mubr.f32.gmra.mxu0 %v635
        %v703 = vpop.f32.mrf.mxu0
        %v704 = vadd.f32 0.0, %v703
        %v705 = vpop.f32.mrf.mxu0
        %v706 = vadd.f32 0.0, %v705
        %707 = vdwg.mxu0
        %v708 = vlaneseq
        %v709 = vshrl.u32 %v708, 7
        %v710 = vsub.s32 1, %v709
        %v711 = vrot.slane %v404, %v710
        %v712 = vlaneseq
        %v713 = vshrl.u32 %v712, 7
        %v714 = vsub.s32 3, %v713
        %v715 = vrot.slane %v404, %v714
        %v718 = vmul.f32 %v415, %v711
        %v719 = vmul.f32 %v416, %v715
        %v720 = vlaneseq
        %v721 = vshrl.u32 %v720, 7
        %v722 = vsub.s32 0, %v721
        %v723 = vrot.slane %v718, %v722
        %v724 = vlaneseq
        %v725 = vshrl.u32 %v724, 7
        %v726 = vsub.s32 0, %v725
        %v727 = vrot.slane %v719, %v726
        %v728 = vmul.f32 %v704, %v723
        %v729 = vmul.f32 %v706, %v727
        %v730 = vadd.f32 %v619, %v728
        %v731 = vadd.f32 %v620, %v729
        %732 = vrot.lane.b32.xlu0 %v391, 1
        %v733 = vpop.permute.xlu0 %732
        %734 = vrot.lane.b32.xlu0 %v393, 1
        %v735 = vpop.permute.xlu0 %734
        %736 = vrot.lane.b32.xlu0 %v392, 1
        %v737 = vpop.permute.xlu0 %736
        %738 = vrot.lane.b32.xlu0 %v394, 1
        %v739 = vpop.permute.xlu0 %738
        %vm740 = vcmp.lt.s32.totalorder %v213, 1
        %v741 = vsel %vm740, %v733, %v737
        %v742 = vsel %vm740, %v735, %v739
        %v743 = vsel %vm740, %v737, %v733
        %v744 = vsel %vm740, %v739, %v735
        %v746 = vsel %vm430, %v398, 0
        %748 = vmatprep.subr.mxu0 0.0
        %749 = vmatpush1.msra.mxu0 0.0
        %750 = vmatprep.subr.mxu0 0.0
        %751 = vmatpush1.msra.mxu0 0.0
        %752 = vmatprep.subr.mxu0 0.0
        %753 = vmatpush1.msra.mxu0 0.0
        %754 = vmatprep.subr.mxu0 0.0
        %755 = vmatpush1.msra.mxu0 0.0
        %756 = vmatprep.subr.mxu0 0.0
        %757 = vmatpush1.msra.mxu0 0.0
        %758 = vmatprep.subr.mxu0 0.0
        %759 = vmatpush1.msra.mxu0 0.0
        %760 = vmatprep.subr.mxu0 0.0
        %761 = vmatpush1.msra.mxu0 0.0
        %762 = vmatprep.subr.mxu0 0.0
        %763 = vmatpush1.msra.mxu0 0.0
        %764 = vmatprep.subr.mxu0 0.0
        %765 = vmatpush1.msra.mxu0 0.0
        %766 = vmatprep.subr.mxu0 0.0
        %767 = vmatpush1.msra.mxu0 0.0
        %768 = vmatprep.subr.mxu0 0.0
        %769 = vmatpush1.msra.mxu0 0.0
        %770 = vmatprep.subr.mxu0 0.0
        %771 = vmatpush1.msra.mxu0 0.0
        %772 = vmatprep.subr.mxu0 0.0
        %773 = vmatpush1.msra.mxu0 0.0
        %774 = vmatprep.subr.mxu0 0.0
        %775 = vmatpush1.msra.mxu0 0.0
        %776 = vmatprep.subr.mxu0 %v742
        %777 = vmatpush1.msra.mxu0 %v744
        %778 = vmatprep.subr.mxu0 %v741
        %779 = vmatpush1.msra.mxu0 %v743
        %780 = vmatprep.subr.mxu0 0.0
        %781 = vmatpush2.msra.mxu0 0.0
        %782 = vmatprep.subr.mxu0 0.0
        %783 = vmatpush2.msra.mxu0 0.0
        %784 = vmatprep.subr.mxu0 0.0
        %785 = vmatpush2.msra.mxu0 0.0
        %786 = vmatprep.subr.mxu0 0.0
        %787 = vmatpush2.msra.mxu0 0.0
        %788 = vmatprep.subr.mxu0 0.0
        %789 = vmatpush2.msra.mxu0 0.0
        %790 = vmatprep.subr.mxu0 0.0
        %791 = vmatpush2.msra.mxu0 0.0
        %792 = vmatprep.subr.mxu0 0.0
        %793 = vmatpush2.msra.mxu0 0.0
        %794 = vmatprep.subr.mxu0 0.0
        %795 = vmatpush2.msra.mxu0 0.0
        %796 = vmatprep.subr.mxu0 0.0
        %797 = vmatpush2.msra.mxu0 0.0
        %798 = vmatprep.subr.mxu0 0.0
        %799 = vmatpush2.msra.mxu0 0.0
        %800 = vmatprep.subr.mxu0 0.0
        %801 = vmatpush2.msra.mxu0 0.0
        %802 = vmatprep.subr.mxu0 0.0
        %803 = vmatpush2.msra.mxu0 0.0
        %804 = vmatprep.subr.mxu0 0.0
        %805 = vmatpush2.msra.mxu0 0.0
        %806 = vmatprep.subr.mxu0 0.0
        %807 = vmatpush2.msra.mxu0 0.0
        %808 = vmatprep.subr.mxu0 0.0
        %809 = vmatpush2.msra.mxu0 0.0
        %810 = vmatprep.subr.mxu0 0.0
        %811 = vmatpush2.msra.mxu0 0.0
        %812 = vmatprep.mubr.f32.mxu0 0.0
        %813 = vmatmul.mubr.f32.gmra.mxu0 %v746
        %v814 = vpop.f32.mrf.mxu0
        %v815 = vadd.f32 0.0, %v814
        %v816 = vpop.f32.mrf.mxu0
        %v817 = vadd.f32 0.0, %v816
        %818 = vdwg.mxu0
        %v819 = vlaneseq
        %v820 = vshrl.u32 %v819, 7
        %v821 = vsub.s32 0, %v820
        %v822 = vrot.slane %v509, %v821
        %v823 = vlaneseq
        %v824 = vshrl.u32 %v823, 7
        %v825 = vsub.s32 0, %v824
        %v826 = vrot.slane %v513, %v825
        %v827 = vmul.f32 %v815, %v822
        %v828 = vmul.f32 %v817, %v826
        %v829 = vadd.f32 %v730, %v827
        %v830 = vadd.f32 %v731, %v828
        %v832 = vsel %vm430, %v399, 0
        %834 = vmatprep.subr.mxu0 0.0
        %835 = vmatpush1.msra.mxu0 0.0
        %836 = vmatprep.subr.mxu0 0.0
        %837 = vmatpush1.msra.mxu0 0.0
        %838 = vmatprep.subr.mxu0 0.0
        %839 = vmatpush1.msra.mxu0 0.0
        %840 = vmatprep.subr.mxu0 0.0
        %841 = vmatpush1.msra.mxu0 0.0
        %842 = vmatprep.subr.mxu0 0.0
        %843 = vmatpush1.msra.mxu0 0.0
        %844 = vmatprep.subr.mxu0 0.0
        %845 = vmatpush1.msra.mxu0 0.0
        %846 = vmatprep.subr.mxu0 0.0
        %847 = vmatpush1.msra.mxu0 0.0
        %848 = vmatprep.subr.mxu0 0.0
        %849 = vmatpush1.msra.mxu0 0.0
        %850 = vmatprep.subr.mxu0 0.0
        %851 = vmatpush1.msra.mxu0 0.0
        %852 = vmatprep.subr.mxu0 0.0
        %853 = vmatpush1.msra.mxu0 0.0
        %854 = vmatprep.subr.mxu0 0.0
        %855 = vmatpush1.msra.mxu0 0.0
        %856 = vmatprep.subr.mxu0 0.0
        %857 = vmatpush1.msra.mxu0 0.0
        %858 = vmatprep.subr.mxu0 0.0
        %859 = vmatpush1.msra.mxu0 0.0
        %860 = vmatprep.subr.mxu0 0.0
        %861 = vmatpush1.msra.mxu0 0.0
        %862 = vmatprep.subr.mxu0 %v394
        %863 = vmatpush1.msra.mxu0 %v393
        %864 = vmatprep.subr.mxu0 %v392
        %865 = vmatpush1.msra.mxu0 %v391
        %866 = vmatprep.subr.mxu0 0.0
        %867 = vmatpush2.msra.mxu0 0.0
        %868 = vmatprep.subr.mxu0 0.0
        %869 = vmatpush2.msra.mxu0 0.0
        %870 = vmatprep.subr.mxu0 0.0
        %871 = vmatpush2.msra.mxu0 0.0
        %872 = vmatprep.subr.mxu0 0.0
        %873 = vmatpush2.msra.mxu0 0.0
        %874 = vmatprep.subr.mxu0 0.0
        %875 = vmatpush2.msra.mxu0 0.0
        %876 = vmatprep.subr.mxu0 0.0
        %877 = vmatpush2.msra.mxu0 0.0
        %878 = vmatprep.subr.mxu0 0.0
        %879 = vmatpush2.msra.mxu0 0.0
        %880 = vmatprep.subr.mxu0 0.0
        %881 = vmatpush2.msra.mxu0 0.0
        %882 = vmatprep.subr.mxu0 0.0
        %883 = vmatpush2.msra.mxu0 0.0
        %884 = vmatprep.subr.mxu0 0.0
        %885 = vmatpush2.msra.mxu0 0.0
        %886 = vmatprep.subr.mxu0 0.0
        %887 = vmatpush2.msra.mxu0 0.0
        %888 = vmatprep.subr.mxu0 0.0
        %889 = vmatpush2.msra.mxu0 0.0
        %890 = vmatprep.subr.mxu0 0.0
        %891 = vmatpush2.msra.mxu0 0.0
        %892 = vmatprep.subr.mxu0 0.0
        %893 = vmatpush2.msra.mxu0 0.0
        %894 = vmatprep.subr.mxu0 0.0
        %895 = vmatpush2.msra.mxu0 0.0
        %896 = vmatprep.subr.mxu0 0.0
        %897 = vmatpush2.msra.mxu0 0.0
        %898 = vmatprep.mubr.f32.mxu0 0.0
        %899 = vmatmul.mubr.f32.gmra.mxu0 %v832
        %v900 = vpop.f32.mrf.mxu0
        %v901 = vadd.f32 0.0, %v900
        %v902 = vpop.f32.mrf.mxu0
        %v903 = vadd.f32 0.0, %v902
        %904 = vdwg.mxu0
        %v905 = vadd.f32 %v829, %v901
        %v906 = vadd.f32 %v830, %v903
        %907 = vrot.lane.b32.xlu0 %v391, 127
        %v908 = vpop.permute.xlu0 %907
        %909 = vrot.lane.b32.xlu0 %v393, 127
        %v910 = vpop.permute.xlu0 %909
        %911 = vrot.lane.b32.xlu0 %v392, 127
        %v912 = vpop.permute.xlu0 %911
        %913 = vrot.lane.b32.xlu0 %v394, 127
        %v914 = vpop.permute.xlu0 %913
        %vm915 = vcmp.lt.s32.totalorder %v213, 127
        %v916 = vsel %vm915, %v908, %v912
        %v917 = vsel %vm915, %v910, %v914
        %v918 = vsel %vm915, %v912, %v908
        %v919 = vsel %vm915, %v914, %v910
        %v921 = vsel %vm430, %v400, 0
        %923 = vmatprep.subr.mxu0 0.0
        %924 = vmatpush1.msra.mxu0 0.0
        %925 = vmatprep.subr.mxu0 0.0
        %926 = vmatpush1.msra.mxu0 0.0
        %927 = vmatprep.subr.mxu0 0.0
        %928 = vmatpush1.msra.mxu0 0.0
        %929 = vmatprep.subr.mxu0 0.0
        %930 = vmatpush1.msra.mxu0 0.0
        %931 = vmatprep.subr.mxu0 0.0
        %932 = vmatpush1.msra.mxu0 0.0
        %933 = vmatprep.subr.mxu0 0.0
        %934 = vmatpush1.msra.mxu0 0.0
        %935 = vmatprep.subr.mxu0 0.0
        %936 = vmatpush1.msra.mxu0 0.0
        %937 = vmatprep.subr.mxu0 0.0
        %938 = vmatpush1.msra.mxu0 0.0
        %939 = vmatprep.subr.mxu0 0.0
        %940 = vmatpush1.msra.mxu0 0.0
        %941 = vmatprep.subr.mxu0 0.0
        %942 = vmatpush1.msra.mxu0 0.0
        %943 = vmatprep.subr.mxu0 0.0
        %944 = vmatpush1.msra.mxu0 0.0
        %945 = vmatprep.subr.mxu0 0.0
        %946 = vmatpush1.msra.mxu0 0.0
        %947 = vmatprep.subr.mxu0 0.0
        %948 = vmatpush1.msra.mxu0 0.0
        %949 = vmatprep.subr.mxu0 0.0
        %950 = vmatpush1.msra.mxu0 0.0
        %951 = vmatprep.subr.mxu0 %v919
        %952 = vmatpush1.msra.mxu0 %v917
        %953 = vmatprep.subr.mxu0 %v918
        %954 = vmatpush1.msra.mxu0 %v916
        %955 = vmatprep.subr.mxu0 0.0
        %956 = vmatpush2.msra.mxu0 0.0
        %957 = vmatprep.subr.mxu0 0.0
        %958 = vmatpush2.msra.mxu0 0.0
        %959 = vmatprep.subr.mxu0 0.0
        %960 = vmatpush2.msra.mxu0 0.0
        %961 = vmatprep.subr.mxu0 0.0
        %962 = vmatpush2.msra.mxu0 0.0
        %963 = vmatprep.subr.mxu0 0.0
        %964 = vmatpush2.msra.mxu0 0.0
        %965 = vmatprep.subr.mxu0 0.0
        %966 = vmatpush2.msra.mxu0 0.0
        %967 = vmatprep.subr.mxu0 0.0
        %968 = vmatpush2.msra.mxu0 0.0
        %969 = vmatprep.subr.mxu0 0.0
        %970 = vmatpush2.msra.mxu0 0.0
        %971 = vmatprep.subr.mxu0 0.0
        %972 = vmatpush2.msra.mxu0 0.0
        %973 = vmatprep.subr.mxu0 0.0
        %974 = vmatpush2.msra.mxu0 0.0
        %975 = vmatprep.subr.mxu0 0.0
        %976 = vmatpush2.msra.mxu0 0.0
        %977 = vmatprep.subr.mxu0 0.0
        %978 = vmatpush2.msra.mxu0 0.0
        %979 = vmatprep.subr.mxu0 0.0
        %980 = vmatpush2.msra.mxu0 0.0
        %981 = vmatprep.subr.mxu0 0.0
        %982 = vmatpush2.msra.mxu0 0.0
        %983 = vmatprep.subr.mxu0 0.0
        %984 = vmatpush2.msra.mxu0 0.0
        %985 = vmatprep.subr.mxu0 0.0
        %986 = vmatpush2.msra.mxu0 0.0
        %987 = vmatprep.mubr.f32.mxu0 0.0
        %988 = vmatmul.mubr.f32.gmra.mxu0 %v921
        %v989 = vpop.f32.mrf.mxu0
        %v990 = vadd.f32 0.0, %v989
        %v991 = vpop.f32.mrf.mxu0
        %v992 = vadd.f32 0.0, %v991
        %993 = vdwg.mxu0
        %v994 = vlaneseq
        %v995 = vshrl.u32 %v994, 7
        %v996 = vsub.s32 1, %v995
        %v997 = vrot.slane %v711, %v996
        %v998 = vlaneseq
        %v999 = vshrl.u32 %v998, 7
        %v1000 = vsub.s32 1, %v999
        %v1001 = vrot.slane %v715, %v1000
        %v1002 = vmul.f32 %v990, %v997
        %v1003 = vmul.f32 %v992, %v1001
        %v1004 = vadd.f32 %v905, %v1002
        %v1005 = vadd.f32 %v906, %v1003
        %v1006 = vadd.s32 %v213, 16
        %v1007 = vadd.s32 %v214, 16
        %vm1008 = vcmp.ge.s32.totalorder %v1006, 0
        %vm1009 = vcmp.ge.s32.totalorder %v1007, 0
        %vm1010 = vcmp.lt.s32.totalorder %v1006, 256
        %vm1011 = vcmp.lt.s32.totalorder %v1007, 256
        %vm1012 = vmand %vm1008, %vm1010
        %vm1013 = vmand %vm1009, %vm1011
        %v1014 = vsel %vm1012, 1, 0
        %v1015 = vsel %vm1013, 1, 0
        %v1016 = vcvt.s32.f32 %v1014
        %v1017 = vcvt.s32.f32 %v1015
        %1018 = vrot.lane.b32.xlu0 %v391, 113
        %v1019 = vpop.permute.xlu0 %1018
        %1020 = vrot.lane.b32.xlu0 %v393, 113
        %v1021 = vpop.permute.xlu0 %1020
        %1022 = vrot.lane.b32.xlu0 %v392, 113
        %v1023 = vpop.permute.xlu0 %1022
        %1024 = vrot.lane.b32.xlu0 %v394, 113
        %v1025 = vpop.permute.xlu0 %1024
        %vm1026 = vcmp.lt.s32.totalorder %v213, 113
        %v1027 = vsel %vm1026, %v1019, %v1023
        %v1028 = vsel %vm1026, %v1021, %v1025
        %v1029 = vsel %vm1026, %v1023, %v1019
        %v1030 = vsel %vm1026, %v1025, %v1021
        %v1032 = vsel %vm430, %v401, 0
        %1034 = vmatprep.subr.mxu0 0.0
        %1035 = vmatpush1.msra.mxu0 0.0
        %1036 = vmatprep.subr.mxu0 0.0
        %1037 = vmatpush1.msra.mxu0 0.0
        %1038 = vmatprep.subr.mxu0 0.0
        %1039 = vmatpush1.msra.mxu0 0.0
        %1040 = vmatprep.subr.mxu0 0.0
        %1041 = vmatpush1.msra.mxu0 0.0
        %1042 = vmatprep.subr.mxu0 0.0
        %1043 = vmatpush1.msra.mxu0 0.0
        %1044 = vmatprep.subr.mxu0 0.0
        %1045 = vmatpush1.msra.mxu0 0.0
        %1046 = vmatprep.subr.mxu0 0.0
        %1047 = vmatpush1.msra.mxu0 0.0
        %1048 = vmatprep.subr.mxu0 0.0
        %1049 = vmatpush1.msra.mxu0 0.0
        %1050 = vmatprep.subr.mxu0 0.0
        %1051 = vmatpush1.msra.mxu0 0.0
        %1052 = vmatprep.subr.mxu0 0.0
        %1053 = vmatpush1.msra.mxu0 0.0
        %1054 = vmatprep.subr.mxu0 0.0
        %1055 = vmatpush1.msra.mxu0 0.0
        %1056 = vmatprep.subr.mxu0 0.0
        %1057 = vmatpush1.msra.mxu0 0.0
        %1058 = vmatprep.subr.mxu0 0.0
        %1059 = vmatpush1.msra.mxu0 0.0
        %1060 = vmatprep.subr.mxu0 0.0
        %1061 = vmatpush1.msra.mxu0 0.0
        %1062 = vmatprep.subr.mxu0 %v1030
        %1063 = vmatpush1.msra.mxu0 %v1028
        %1064 = vmatprep.subr.mxu0 %v1029
        %1065 = vmatpush1.msra.mxu0 %v1027
        %1066 = vmatprep.subr.mxu0 0.0
        %1067 = vmatpush2.msra.mxu0 0.0
        %1068 = vmatprep.subr.mxu0 0.0
        %1069 = vmatpush2.msra.mxu0 0.0
        %1070 = vmatprep.subr.mxu0 0.0
        %1071 = vmatpush2.msra.mxu0 0.0
        %1072 = vmatprep.subr.mxu0 0.0
        %1073 = vmatpush2.msra.mxu0 0.0
        %1074 = vmatprep.subr.mxu0 0.0
        %1075 = vmatpush2.msra.mxu0 0.0
        %1076 = vmatprep.subr.mxu0 0.0
        %1077 = vmatpush2.msra.mxu0 0.0
        %1078 = vmatprep.subr.mxu0 0.0
        %1079 = vmatpush2.msra.mxu0 0.0
        %1080 = vmatprep.subr.mxu0 0.0
        %1081 = vmatpush2.msra.mxu0 0.0
        %1082 = vmatprep.subr.mxu0 0.0
        %1083 = vmatpush2.msra.mxu0 0.0
        %1084 = vmatprep.subr.mxu0 0.0
        %1085 = vmatpush2.msra.mxu0 0.0
        %1086 = vmatprep.subr.mxu0 0.0
        %1087 = vmatpush2.msra.mxu0 0.0
        %1088 = vmatprep.subr.mxu0 0.0
        %1089 = vmatpush2.msra.mxu0 0.0
        %1090 = vmatprep.subr.mxu0 0.0
        %1091 = vmatpush2.msra.mxu0 0.0
        %1092 = vmatprep.subr.mxu0 0.0
        %1093 = vmatpush2.msra.mxu0 0.0
        %1094 = vmatprep.subr.mxu0 0.0
        %1095 = vmatpush2.msra.mxu0 0.0
        %1096 = vmatprep.subr.mxu0 0.0
        %1097 = vmatpush2.msra.mxu0 0.0
        %1098 = vmatprep.mubr.f32.mxu0 0.0
        %1099 = vmatmul.mubr.f32.gmra.mxu0 %v1032
        %v1100 = vpop.f32.mrf.mxu0
        %v1101 = vadd.f32 0.0, %v1100
        %v1102 = vpop.f32.mrf.mxu0
        %v1103 = vadd.f32 0.0, %v1102
        %1104 = vdwg.mxu0
        %v1105 = vmul.f32 %v1016, %v509
        %v1106 = vmul.f32 %v1017, %v513
        %v1107 = vlaneseq
        %v1108 = vshrl.u32 %v1107, 7
        %v1109 = vsub.s32 0, %v1108
        %v1110 = vrot.slane %v1105, %v1109
        %v1111 = vlaneseq
        %v1112 = vshrl.u32 %v1111, 7
        %v1113 = vsub.s32 0, %v1112
        %v1114 = vrot.slane %v1106, %v1113
        %v1115 = vmul.f32 %v1101, %v1110
        %v1116 = vmul.f32 %v1103, %v1114
        %v1117 = vadd.f32 %v1004, %v1115
        %v1118 = vadd.f32 %v1005, %v1116
        %1119 = vrot.lane.b32.xlu0 %v391, 112
        %v1120 = vpop.permute.xlu0 %1119
        %1121 = vrot.lane.b32.xlu0 %v393, 112
        %v1122 = vpop.permute.xlu0 %1121
        %1123 = vrot.lane.b32.xlu0 %v392, 112
        %v1124 = vpop.permute.xlu0 %1123
        %1125 = vrot.lane.b32.xlu0 %v394, 112
        %v1126 = vpop.permute.xlu0 %1125
        %vm1127 = vcmp.lt.s32.totalorder %v213, 112
        %v1128 = vsel %vm1127, %v1120, %v1124
        %v1129 = vsel %vm1127, %v1122, %v1126
        %v1130 = vsel %vm1127, %v1124, %v1120
        %v1131 = vsel %vm1127, %v1126, %v1122
        %v1133 = vsel %vm430, %v402, 0
        %1135 = vmatprep.subr.mxu0 0.0
        %1136 = vmatpush1.msra.mxu0 0.0
        %1137 = vmatprep.subr.mxu0 0.0
        %1138 = vmatpush1.msra.mxu0 0.0
        %1139 = vmatprep.subr.mxu0 0.0
        %1140 = vmatpush1.msra.mxu0 0.0
        %1141 = vmatprep.subr.mxu0 0.0
        %1142 = vmatpush1.msra.mxu0 0.0
        %1143 = vmatprep.subr.mxu0 0.0
        %1144 = vmatpush1.msra.mxu0 0.0
        %1145 = vmatprep.subr.mxu0 0.0
        %1146 = vmatpush1.msra.mxu0 0.0
        %1147 = vmatprep.subr.mxu0 0.0
        %1148 = vmatpush1.msra.mxu0 0.0
        %1149 = vmatprep.subr.mxu0 0.0
        %1150 = vmatpush1.msra.mxu0 0.0
        %1151 = vmatprep.subr.mxu0 0.0
        %1152 = vmatpush1.msra.mxu0 0.0
        %1153 = vmatprep.subr.mxu0 0.0
        %1154 = vmatpush1.msra.mxu0 0.0
        %1155 = vmatprep.subr.mxu0 0.0
        %1156 = vmatpush1.msra.mxu0 0.0
        %1157 = vmatprep.subr.mxu0 0.0
        %1158 = vmatpush1.msra.mxu0 0.0
        %1159 = vmatprep.subr.mxu0 0.0
        %1160 = vmatpush1.msra.mxu0 0.0
        %1161 = vmatprep.subr.mxu0 0.0
        %1162 = vmatpush1.msra.mxu0 0.0
        %1163 = vmatprep.subr.mxu0 %v1131
        %1164 = vmatpush1.msra.mxu0 %v1129
        %1165 = vmatprep.subr.mxu0 %v1130
        %1166 = vmatpush1.msra.mxu0 %v1128
        %1167 = vmatprep.subr.mxu0 0.0
        %1168 = vmatpush2.msra.mxu0 0.0
        %1169 = vmatprep.subr.mxu0 0.0
        %1170 = vmatpush2.msra.mxu0 0.0
        %1171 = vmatprep.subr.mxu0 0.0
        %1172 = vmatpush2.msra.mxu0 0.0
        %1173 = vmatprep.subr.mxu0 0.0
        %1174 = vmatpush2.msra.mxu0 0.0
        %1175 = vmatprep.subr.mxu0 0.0
        %1176 = vmatpush2.msra.mxu0 0.0
        %1177 = vmatprep.subr.mxu0 0.0
        %1178 = vmatpush2.msra.mxu0 0.0
        %1179 = vmatprep.subr.mxu0 0.0
        %1180 = vmatpush2.msra.mxu0 0.0
        %1181 = vmatprep.subr.mxu0 0.0
        %1182 = vmatpush2.msra.mxu0 0.0
        %1183 = vmatprep.subr.mxu0 0.0
        %1184 = vmatpush2.msra.mxu0 0.0
        %1185 = vmatprep.subr.mxu0 0.0
        %1186 = vmatpush2.msra.mxu0 0.0
        %1187 = vmatprep.subr.mxu0 0.0
        %1188 = vmatpush2.msra.mxu0 0.0
        %1189 = vmatprep.subr.mxu0 0.0
        %1190 = vmatpush2.msra.mxu0 0.0
        %1191 = vmatprep.subr.mxu0 0.0
        %1192 = vmatpush2.msra.mxu0 0.0
        %1193 = vmatprep.subr.mxu0 0.0
        %1194 = vmatpush2.msra.mxu0 0.0
        %1195 = vmatprep.subr.mxu0 0.0
        %1196 = vmatpush2.msra.mxu0 0.0
        %1197 = vmatprep.subr.mxu0 0.0
        %1198 = vmatpush2.msra.mxu0 0.0
        %1199 = vmatprep.mubr.f32.mxu0 0.0
        %1200 = vmatmul.mubr.f32.gmra.mxu0 %v1133
        %v1201 = vpop.f32.mrf.mxu0
        %v1202 = vadd.f32 0.0, %v1201
        %v1203 = vpop.f32.mrf.mxu0
        %v1204 = vadd.f32 0.0, %v1203
        %1205 = vdwg.mxu0
        %v1206 = vmul.f32 %v1202, %v1016
        %v1207 = vmul.f32 %v1204, %v1017
        %v1208 = vadd.f32 %v1117, %v1206
        %v1209 = vadd.f32 %v1118, %v1207
        %1210 = vrot.lane.b32.xlu0 %v391, 111
        %v1211 = vpop.permute.xlu0 %1210
        %1212 = vrot.lane.b32.xlu0 %v393, 111
        %v1213 = vpop.permute.xlu0 %1212
        %1214 = vrot.lane.b32.xlu0 %v392, 111
        %v1215 = vpop.permute.xlu0 %1214
        %1216 = vrot.lane.b32.xlu0 %v394, 111
        %v1217 = vpop.permute.xlu0 %1216
        %vm1218 = vcmp.lt.s32.totalorder %v213, 111
        %v1219 = vsel %vm1218, %v1211, %v1215
        %v1220 = vsel %vm1218, %v1213, %v1217
        %v1221 = vsel %vm1218, %v1215, %v1211
        %v1222 = vsel %vm1218, %v1217, %v1213
        %v1224 = vsel %vm430, %v403, 0
        %1226 = vmatprep.subr.mxu0 0.0
        %1227 = vmatpush1.msra.mxu0 0.0
        %1228 = vmatprep.subr.mxu0 0.0
        %1229 = vmatpush1.msra.mxu0 0.0
        %1230 = vmatprep.subr.mxu0 0.0
        %1231 = vmatpush1.msra.mxu0 0.0
        %1232 = vmatprep.subr.mxu0 0.0
        %1233 = vmatpush1.msra.mxu0 0.0
        %1234 = vmatprep.subr.mxu0 0.0
        %1235 = vmatpush1.msra.mxu0 0.0
        %1236 = vmatprep.subr.mxu0 0.0
        %1237 = vmatpush1.msra.mxu0 0.0
        %1238 = vmatprep.subr.mxu0 0.0
        %1239 = vmatpush1.msra.mxu0 0.0
        %1240 = vmatprep.subr.mxu0 0.0
        %1241 = vmatpush1.msra.mxu0 0.0
        %1242 = vmatprep.subr.mxu0 0.0
        %1243 = vmatpush1.msra.mxu0 0.0
        %1244 = vmatprep.subr.mxu0 0.0
        %1245 = vmatpush1.msra.mxu0 0.0
        %1246 = vmatprep.subr.mxu0 0.0
        %1247 = vmatpush1.msra.mxu0 0.0
        %1248 = vmatprep.subr.mxu0 0.0
        %1249 = vmatpush1.msra.mxu0 0.0
        %1250 = vmatprep.subr.mxu0 0.0
        %1251 = vmatpush1.msra.mxu0 0.0
        %1252 = vmatprep.subr.mxu0 0.0
        %1253 = vmatpush1.msra.mxu0 0.0
        %1254 = vmatprep.subr.mxu0 %v1222
        %1255 = vmatpush1.msra.mxu0 %v1220
        %1256 = vmatprep.subr.mxu0 %v1221
        %1257 = vmatpush1.msra.mxu0 %v1219
        %1258 = vmatprep.subr.mxu0 0.0
        %1259 = vmatpush2.msra.mxu0 0.0
        %1260 = vmatprep.subr.mxu0 0.0
        %1261 = vmatpush2.msra.mxu0 0.0
        %1262 = vmatprep.subr.mxu0 0.0
        %1263 = vmatpush2.msra.mxu0 0.0
        %1264 = vmatprep.subr.mxu0 0.0
        %1265 = vmatpush2.msra.mxu0 0.0
        %1266 = vmatprep.subr.mxu0 0.0
        %1267 = vmatpush2.msra.mxu0 0.0
        %1268 = vmatprep.subr.mxu0 0.0
        %1269 = vmatpush2.msra.mxu0 0.0
        %1270 = vmatprep.subr.mxu0 0.0
        %1271 = vmatpush2.msra.mxu0 0.0
        %1272 = vmatprep.subr.mxu0 0.0
        %1273 = vmatpush2.msra.mxu0 0.0
        %1274 = vmatprep.subr.mxu0 0.0
        %1275 = vmatpush2.msra.mxu0 0.0
        %1276 = vmatprep.subr.mxu0 0.0
        %1277 = vmatpush2.msra.mxu0 0.0
        %1278 = vmatprep.subr.mxu0 0.0
        %1279 = vmatpush2.msra.mxu0 0.0
        %1280 = vmatprep.subr.mxu0 0.0
        %1281 = vmatpush2.msra.mxu0 0.0
        %1282 = vmatprep.subr.mxu0 0.0
        %1283 = vmatpush2.msra.mxu0 0.0
        %1284 = vmatprep.subr.mxu0 0.0
        %1285 = vmatpush2.msra.mxu0 0.0
        %1286 = vmatprep.subr.mxu0 0.0
        %1287 = vmatpush2.msra.mxu0 0.0
        %1288 = vmatprep.subr.mxu0 0.0
        %1289 = vmatpush2.msra.mxu0 0.0
        %1290 = vmatprep.mubr.f32.mxu0 0.0
        %1291 = vmatmul.mubr.f32.gmra.mxu0 %v1224
        %v1292 = vpop.f32.mrf.mxu0
        %v1293 = vadd.f32 0.0, %v1292
        %v1294 = vpop.f32.mrf.mxu0
        %v1295 = vadd.f32 0.0, %v1294
        %1296 = vdwg.mxu0
        %v1297 = vmul.f32 %v1016, %v711
        %v1298 = vmul.f32 %v1017, %v715
        %v1299 = vlaneseq
        %v1300 = vshrl.u32 %v1299, 7
        %v1301 = vsub.s32 0, %v1300
        %v1302 = vrot.slane %v1297, %v1301
        %v1303 = vlaneseq
        %v1304 = vshrl.u32 %v1303, 7
        %v1305 = vsub.s32 0, %v1304
        %v1306 = vrot.slane %v1298, %v1305
        %v1307 = vmul.f32 %v1293, %v1302
        %v1308 = vmul.f32 %v1295, %v1306
        %v1309 = vadd.f32 %v1208, %v1307
        %v1310 = vadd.f32 %v1209, %v1308
        %1311 = vst [vmem:[%s205] sm:$0xf] %v211
        %1312 = vst [vmem:[%s205 + $0x8] sm:$0xf] %v216
        %v1315 = vrot.slane %v1309, 4
        %v1316 = vrot.slane %v1310, 4
        %1319 = vst [vmem:[%s205] sm:$0xf0] %v1315
        %1320 = vst [vmem:[%s205 + $0x8] sm:$0xf0] %v1316
        %s1321 = sand.u32 %s116, 1
        %s1322 = scalar_lea.sflag [#allocation4], %s1321
        %s1323 = sand.u32 %s116, 1
        %s1324 = smul.addr %s1323, 16
        %s1325 = scalar_lea.vmem [#allocation5], %s1324
        // Predicated region
        $region41: #{tpu_custom_call.1} parent=35 // pred_check
          %p1326 = pneg %p126
        $region42: #{tpu_custom_call.1} parent=35 // pred_check_branch
          %1328 = sbr.rel (%p1326) target = $region44
        $region43: #{tpu_custom_call.1} parent=35 // pred_region
          %s1330 = ssub.s32 256, 256
          %1331 = vsyncadd %s1322, %s1330
          %s1332 = smul.addr %s19, 2
          %s1333 = smul.addr %s1332, 128
          %s1334 = scalar_lea.hbm %s4, %s1333
          %s1336 = sshll.u32 %s1325, 4
          %s1337 = int_to_ptr.vmem [resolvable:$true] %s1336
          %1339 = dma.vmem_to_hbm [thread:$0]  %s1337, 256, %s1334, %s1322
        $region44: #{tpu_custom_call.1} parent=35 // pred_fallthru
          _
      $region36: #{tpu_custom_call.1} parent=5 // pred_fallthru
        _
      %p1340 = scmp.le.s32.totalorder 2, %s14
      // Predicated region
      $region45: #{tpu_custom_call.1} parent=5 // pred_check
        %p1341 = pneg %p1340
      $region46: #{tpu_custom_call.1} parent=5 // pred_check_branch
        %1343 = sbr.rel (%p1341) target = $region48
      $region47: #{tpu_custom_call.1} parent=5 // pred_region
        %s1344 = ssub.s32 %s14, 2
        // Predicated region
        $region49: #{tpu_custom_call.1} parent=47 // pred_check
          %p1345 = pneg %p132
        $region50: #{tpu_custom_call.1} parent=47 // pred_check_branch
          %1347 = sbr.rel (%p1345) target = $region52
        $region51: #{tpu_custom_call.1} parent=47 // pred_region
          %s1348 = sand.u32 %s117, 1
          %s1349 = scalar_lea.sflag [#allocation4], %s1348
          %s1350 = sand.u32 %s117, 1
          %s1351 = smul.addr %s1350, 16
          %s1352 = scalar_lea.vmem [#allocation5], %s1351
          %1353 = dma.done %s1349, 256
        $region52: #{tpu_custom_call.1} parent=47 // pred_fallthru
          _
      $region48: #{tpu_custom_call.1} parent=5 // pred_fallthru
        _
    $region6: #{tpu_custom_call.1} parent=1 // loop_footer
      %s18 = sadd.s32 1, %s14
    $region7: #{tpu_custom_call.1} parent=1 // loop_footer_branch
      %13 = sbr.rel target = $region3
    $region8: #{tpu_custom_call.1} parent=1 // loop_exit
      _
    %1354 = vsyncpa [#allocation3], 1
    %s1355 = scalar_lea.sflag [#allocation3], 1
    %1356 = vsyncpa %s1355, 1
    %1357 = vsyncpa [#allocation4], 1
    %s1358 = scalar_lea.sflag [#allocation4], 1
    %1359 = vsyncpa %s1358, 1

</llo_original>
